<compile_context>
chip_gen: v7x
topology: tpu7x:2x2x1
jax: 0.10.0
libtpu: 0.0.40
codegen_flags: <defaults>
</compile_context>

<pallas_src>
import numpy as np
import jax
import jax.numpy as jnp
from jax import lax
from jax.experimental import pallas as pl
from jax.experimental.pallas import tpu as pltpu


# Set to jnp.bfloat16 on v6e/v7x for more MXU throughput (keep f32 accumulation).
_DOT_DTYPE = jnp.float32


# ------------------------------ Pallas kernels ------------------------------

def _make_conv_kernel(bt, H, lane_sizes, NO, apply_in_act):
    """Fused 3x3 'same' conv over `bt` images per grid step.

    ref order: x_refs(n_in), banded_w_ref, [scale_ref, shift_ref],
               o_ref, stats_ref, pad_scratch
    """
    Hp = H + 2
    Mtot = bt * Hp          # pad rows: bt images, each with its own 2 halo rows
    Macc = Mtot - 2         # matmul M (2 discarded rows per image boundary)
    n_in = len(lane_sizes)
    offs = [0]
    for s in lane_sizes:
        offs.append(offs[-1] + s)
    Ktot = offs[-1]

    def kernel(*refs):
        x_refs = refs[:n_in]
        w_ref = refs[n_in]
        idx = n_in + 1
        if apply_in_act:
            s_ref, t_ref = refs[idx], refs[idx + 1]
            idx += 2
        o_ref, stats_ref = refs[idx], refs[idx + 1]
        pad = refs[idx + 2]

        # Zero only the halo rows; interiors are fully overwritten below.
        zrow = jnp.zeros((1, Ktot), jnp.float32)
        for b in range(bt):
            pad[b * Hp:b * Hp + 1, :] = zrow
            pad[(b + 1) * Hp - 1:(b + 1) * Hp, :] = zrow

        # Fused channel concat: each input occupies a contiguous lane block of
        # the shared pad scratch (offsets are 128-multiples at production
        # channel counts).  The previous block's BN+ReLU is fused in here.
        for i in range(n_in):
            x = x_refs[i][...]                           # (bt, H, lane) lane-dense
            if apply_in_act:
                x = jnp.maximum(x * s_ref[...] + t_ref[...], 0.0)
            for b in range(bt):
                pad[b * Hp + 1:b * Hp + 1 + H, offs[i]:offs[i + 1]] = x[b]

        # 3 MXU dots: M = bt*(H+2)-2, K = W*Cin_total (W-padding folded into
        # the banded weights), N = W*Cout.
        acc = jnp.zeros((Macc, NO), jnp.float32)
        for kh in range(3):
            acc = acc + jnp.dot(
                pad[kh:kh + Macc, :].astype(_DOT_DTYPE),
                w_ref[kh].astype(_DOT_DTYPE),
                preferred_element_type=jnp.float32)

        # Per-step [sum; sum_sq] so BatchNorm stats never re-read y from HBM.
        s1 = jnp.zeros((1, NO), jnp.float32)
        s2 = jnp.zeros((1, NO), jnp.float32)
        for b in range(bt):
            yb = acc[b * Hp:b * Hp + H, :]
            o_ref[b] = yb.astype(o_ref.dtype)
            s1 = s1 + jnp.sum(yb, axis=0, keepdims=True)
            s2 = s2 + jnp.sum(yb * yb, axis=0, keepdims=True)
        stats_ref[0:1, :] = s1
        stats_ref[1:2, :] = s2

    return kernel


def bn_relu_kernel(x_ref, scale_ref, shift_ref, o_ref):
    """Lane-dense per-channel affine (folded BatchNorm) + ReLU on (rows, W*C)."""
    o_ref[...] = jnp.maximum(x_ref[...] * scale_ref[...] + shift_ref[...],
                             0.0).astype(o_ref.dtype)


# ----------------------------- Pallas wrappers ------------------------------

def conv3x3_fused(xs, banded_w, W, Cout, bt, scale_row=None, shift_row=None):
    """xs[i]: (B, H, lane_i) flat-row activations (lane_i = W*Ci; contiguous
    lane block per input = fused channel concat).
    banded_w: (3, sum(lane_i), W*Cout), 'same' W-padding folded in.
    Returns (y, stats): y (B, H, W*Cout); stats (nsteps, 2, W*Cout)."""
    apply_act = scale_row is not None
    assert (not apply_act) or len(xs) == 1
    B, H = xs[0].shape[0], xs[0].shape[1]
    lanes = [int(x.shape[2]) for x in xs]
    Ktot = sum(lanes)
    NO = W * Cout
    assert banded_w.shape == (3, Ktot, NO)
    assert B % bt == 0
    nsteps = B // bt
    Hp = H + 2

    in_specs = [pl.BlockSpec((bt, H, l), lambda i: (i, 0, 0)) for l in lanes]
    # Constant-index weight block.  TODO(synk): pipeline_mode=pl.Buffered(1) on
    # this spec for production-size banded weights (halves VMEM on v7x).
    in_specs.append(pl.BlockSpec((3, Ktot, NO), lambda i: (0, 0, 0)))
    inputs = list(xs) + [banded_w]
    if apply_act:
        in_specs += [pl.BlockSpec((1, lanes[0]), lambda i: (0, 0)),
                     pl.BlockSpec((1, lanes[0]), lambda i: (0, 0))]
        inputs += [scale_row, shift_row]

    kernel = _make_conv_kernel(bt, H, tuple(lanes), NO, apply_act)
    y, stats = pl.pallas_call(
        kernel,
        out_shape=(jax.ShapeDtypeStruct((B, H, NO), jnp.float32),
                   jax.ShapeDtypeStruct((nsteps, 2, NO), jnp.float32)),
        grid=(nsteps,),
        in_specs=in_specs,
        out_specs=(pl.BlockSpec((bt, H, NO), lambda i: (i, 0, 0)),
                   pl.BlockSpec((None, 2, NO), lambda i: (i, 0, 0))),
        scratch_shapes=[pltpu.VMEM((bt * Hp, Ktot), jnp.float32)],
        compiler_params=pltpu.CompilerParams(dimension_semantics=("parallel",)),
    )(*inputs)
    return y, stats


def bn_relu_pallas(y_flat, scale_row, shift_row, max_rows=2048):
    """y_flat: (R, W*C) flat rows; scale/shift: (1, W*C) channel rows.
    Runs the whole slab in as few (large) blocks as possible."""
    R, NO = y_flat.shape
    rpb = min(R, max_rows)
    while R % rpb:
        rpb -= 1
    return pl.pallas_call(
        bn_relu_kernel,
        out_shape=jax.ShapeDtypeStruct((R, NO), y_flat.dtype),
        grid=(R // rpb,),
        in_specs=[pl.BlockSpec((rpb, NO), lambda i: (i, 0)),
                  pl.BlockSpec((1, NO), lambda i: (0, 0)),
                  pl.BlockSpec((1, NO), lambda i: (0, 0))],
        out_specs=pl.BlockSpec((rpb, NO), lambda i: (i, 0)),
        compiler_params=pltpu.CompilerParams(dimension_semantics=("parallel",)),
    )(y_flat, scale_row, shift_row)


# -------------------------------- JAX glue ----------------------------------

def make_banded_weights(w_hwio, W):
    """(3,3,Cin,Cout) HWIO -> (3, W*Cin, W*Cout) per-kh banded matrices with the
    'same' W-padding folded in (out-of-range kw taps omitted):
      banded[kh, w_in*Cin+ci, w_out*Cout+co] = w[kh, w_in-w_out+1, ci, co]."""
    kH, kW, Ci, Co = w_hwio.shape
    kw_idx = jnp.arange(W)[:, None] - jnp.arange(W)[None, :] + (kW // 2)  # (Win, Wout)
    onehot = jnp.stack([(kw_idx == k) for k in range(kW)], axis=-1)        # (Win, Wout, kW)
    banded = jnp.einsum('pwk,akio->apiwo', onehot.astype(w_hwio.dtype), w_hwio)
    return banded.reshape(kH, W * Ci, W * Co)


def prepare_banded_weights(w1, w2, c2, W):
    """Hoisted out of the hot forward path: recompute only when weights change.
    conv1's concat is fused by concatenating the x2-half and x1-half of w1
    along the K axis (matching the [x2-block | x1-block] pad layout)."""
    wb1 = jnp.concatenate([make_banded_weights(w1[:, :, :c2, :], W),
                           make_banded_weights(w1[:, :, c2:, :], W)], axis=1)
    wb2 = make_banded_weights(w2, W)
    return wb1, wb2


def fold_batchnorm_from_stats(stats, B, H, W, Cout, gamma, beta, eps=1e-5):
    """Training-mode BatchNorm2d scale/shift from in-kernel sum / sum-of-squares.
    (E[x^2]-mean^2 in f32: fine at these activation magnitudes.)"""
    tot = stats.sum(axis=0).reshape(2, W, Cout).sum(axis=1)            # (2, Cout)
    n = B * H * W
    mean = tot[0] / n
    var = tot[1] / n - mean * mean                                     # biased, like PyTorch
    scale = gamma * lax.rsqrt(var + eps)
    shift = beta - mean * scale
    return scale, shift


def _tile_row(v, W):
    return jnp.tile(v, W)[None, :]                                     # (1, W*C)


def _choose_bt(B, H):
    """Images per grid step: target MXU M ~ 128 rows while dividing B."""
    bt = min(B, max(1, (128 + H + 1) // (H + 2)))
    while B % bt:
        bt -= 1
    return bt


def upsample2x_bilinear_nhwc(x):
    """(B, H, W, C) -> (B, 2H, 2W, C); nn.Upsample(bilinear, align_corners=True)."""
    B, H1, W1, C = x.shape
    H2, W2 = 2 * H1, 2 * W1
    ys = jnp.arange(H2, dtype=jnp.float32) * ((H1 - 1) / (H2 - 1))
    xs = jnp.arange(W2, dtype=jnp.float32) * ((W1 - 1) / (W2 - 1))
    y0 = jnp.clip(jnp.floor(ys).astype(jnp.int32), 0, H1 - 1)
    x0 = jnp.clip(jnp.floor(xs).astype(jnp.int32), 0, W1 - 1)
    y1 = jnp.minimum(y0 + 1, H1 - 1)
    x1 = jnp.minimum(x0 + 1, W1 - 1)
    wy = (ys - y0.astype(jnp.float32))[None, :, None, None]
    wx = (xs - x0.astype(jnp.float32))[None, None, :, None]
    r0 = x[:, y0, :, :]
    r1 = x[:, y1, :, :]
    a = r0[:, :, x0, :] * (1.0 - wx) + r0[:, :, x1, :] * wx
    b = r1[:, :, x0, :] * (1.0 - wx) + r1[:, :, x1, :] * wx
    return a * (1.0 - wy) + b * wy


@jax.jit
def up_forward(x1, x2, wb1, wb2, g1, b1, g2, b2):
    """x1: (B, C1, H/2, W/2), x2: (B, C2, H, W) NCHW  ->  (B, Cout, H, W) NCHW."""
    eps = 1e-5
    B, C1 = x1.shape[0], x1.shape[1]
    C2, H, W = x2.shape[1], x2.shape[2], x2.shape[3]
    Cout = wb2.shape[2] // W
    bt = _choose_bt(B, H)

    # TODO(synk): bilinear-upsample gather and NCHW<->NHWC transposes stay in
    # XLA (pure gather / layout ops with no profitable Pallas form here).
    x1u = upsample2x_bilinear_nhwc(jnp.transpose(x1, (0, 2, 3, 1)))    # (B,H,W,C1)
    x2n = jnp.transpose(x2, (0, 2, 3, 1))                              # (B,H,W,C2)
    x2f = x2n.reshape(B, H, W * C2)        # free flat-row views (contiguous)
    x1f = x1u.reshape(B, H, W * C1)

    # conv1: torch.cat([x2, x1], dim=1) fused as contiguous lane blocks in the
    # kernel pad scratch, against the K-concatenated banded weight wb1.
    y1, st1 = conv3x3_fused([x2f, x1f], wb1, W, Cout, bt)
    scale1, shift1 = fold_batchnorm_from_stats(st1, B, H, W, Cout, g1, b1, eps)

    # conv2: BN1 + ReLU fused into its input path.
    y2, st2 = conv3x3_fused([y1], wb2, W, Cout, bt,
                            scale_row=_tile_row(scale1, W),
                            shift_row=_tile_row(shift1, W))
    scale2, shift2 = fold_batchnorm_from_stats(st2, B, H, W, Cout, g2, b2, eps)

    # final BN2 + ReLU: lane-dense elementwise pass on the (B*H, W*Cout) slab.
    out_flat = bn_relu_pallas(y2.reshape(B * H, W * Cout),
                              _tile_row(scale2, W), _tile_row(shift2, W))
    out = out_flat.reshape(B, H, W, Cout)
    return jnp.transpose(out, (0, 3, 1, 2))


# --------------------------- pure-JAX reference -----------------------------

def ref_forward(x1, x2, w1, g1, b1, w2, g2, b2, eps=1e-5):
    x1u = upsample2x_bilinear_nhwc(jnp.transpose(x1, (0, 2, 3, 1)))
    x2n = jnp.transpose(x2, (0, 2, 3, 1))
    x = jnp.concatenate([x2n, x1u], axis=-1)
    dn = ("NHWC", "HWIO", "NHWC")

    def block(xin, w, g, b):
        y = lax.conv_general_dilated(xin, w, (1, 1), "SAME", dimension_numbers=dn)
        m = jnp.mean(y, axis=(0, 1, 2))
        v = jnp.var(y, axis=(0, 1, 2))
        return jnp.maximum((y - m) / jnp.sqrt(v + eps) * g + b, 0.0)

    a1 = block(x, w1, g1, b1)
    a2 = block(a1, w2, g2, b2)
    return jnp.transpose(a2, (0, 3, 1, 2))


# ---------------------------------- main ------------------------------------

if __name__ == "__main__":
    B, C1, C2, H1, W1 = 2, 4, 4, 8, 8          # x1 small map; x2 at 2x resolution
    in_channels = C1 + C2                       # 8
    out_channels = 8                            # -> W*Cout = 128 (lane-dense)

    key = jax.random.PRNGKey(0)
    k_x1, k_x2, k_w1, k_w2, k_g1, k_b1, k_g2, k_b2 = jax.random.split(key, 8)

    x1 = jax.random.normal(k_x1, (B, C1, H1, W1), jnp.float32)
    x2 = jax.random.normal(k_x2, (B, C2, 2 * H1, 2 * W1), jnp.float32)

    # HWIO conv weights (no bias); BN gamma/beta exercised with non-trivial values.
    w1 = 0.1 * jax.random.normal(k_w1, (3, 3, in_channels, out_channels), jnp.float32)
    w2 = 0.1 * jax.random.normal(k_w2, (3, 3, out_channels, out_channels), jnp.float32)
    g1 = 1.0 + 0.1 * jax.random.normal(k_g1, (out_channels,), jnp.float32)
    b1 = 0.1 * jax.random.normal(k_b1, (out_channels,), jnp.float32)
    g2 = 1.0 + 0.1 * jax.random.normal(k_g2, (out_channels,), jnp.float32)
    b2 = 0.1 * jax.random.normal(k_b2, (out_channels,), jnp.float32)

    # Banded weights are a function of the conv weights only: built once here,
    # reused every forward call (hoisted out of the hot path).
    wb1, wb2 = prepare_banded_weights(w1, w2, C2, 2 * W1)

    out = jax.block_until_ready(up_forward(x1, x2, wb1, wb2, g1, b1, g2, b2))

    ref = ref_forward(x1, x2, w1, g1, b1, w2, g2, b2)
    np.testing.assert_allclose(np.asarray(out), np.asarray(ref), rtol=2e-4, atol=2e-4)

    print("KERNEL_OK")
</pallas_src>

<mosaic_0001>
module attributes {stable_mosaic.version = 11 : i64} {
  func.func @kernel(%arg0: i32, %arg1: memref<2x16x64xf32, #tpu.memory_space<vmem>>, %arg2: memref<2x16x64xf32, #tpu.memory_space<vmem>>, %arg3: memref<3x128x128xf32, #tpu.memory_space<vmem>>, %arg4: memref<2x16x128xf32, #tpu.memory_space<vmem>>, %arg5: memref<1x2x128xf32, #tpu.memory_space<vmem>>, %arg6: memref<36x128xf32, #tpu.memory_space<vmem>>) attributes {dimension_semantics = [#tpu.dimension_semantics<parallel>], iteration_bounds = array<i64: 1>, scalar_prefetch = 0 : i64, scratch_operands = 1 : i64, tpu.core_type = #tpu.core_type<tc>, window_params = [{transform_indices = @transform_0, window_bounds = array<i64: 2, 16, 64>}, {transform_indices = @transform_1, window_bounds = array<i64: 2, 16, 64>}, {pipeline_mode = #tpu.pipeline_mode<synchronous>, transform_indices = @transform_2, window_bounds = array<i64: 3, 128, 128>}, {transform_indices = @transform_3, window_bounds = array<i64: 2, 16, 128>}, {transform_indices = @transform_4, window_bounds = array<i64: 1, 2, 128>}]} {
    %cst = arith.constant 0.000000e+00 : f32
    %0 = vector.broadcast %cst : f32 to vector<1x128xf32>
    %c0 = arith.constant 0 : index
    %c0_0 = arith.constant 0 : index
    %1 = vector.load %arg6[%c0, %c0_0] : memref<36x128xf32, #tpu.memory_space<vmem>>, vector<1x128xf32>
    tpu.vector_store %arg6[%c0, %c0_0], %0 {strides = array<i32>} : memref<36x128xf32, #tpu.memory_space<vmem>>, vector<1x128xf32>,
    %c17 = arith.constant 17 : index
    %c0_1 = arith.constant 0 : index
    %2 = vector.load %arg6[%c17, %c0_1] : memref<36x128xf32, #tpu.memory_space<vmem>>, vector<1x128xf32>
    tpu.vector_store %arg6[%c17, %c0_1], %0 {strides = array<i32>} : memref<36x128xf32, #tpu.memory_space<vmem>>, vector<1x128xf32>,
    %c18 = arith.constant 18 : index
    %c0_2 = arith.constant 0 : index
    %3 = vector.load %arg6[%c18, %c0_2] : memref<36x128xf32, #tpu.memory_space<vmem>>, vector<1x128xf32>
    tpu.vector_store %arg6[%c18, %c0_2], %0 {strides = array<i32>} : memref<36x128xf32, #tpu.memory_space<vmem>>, vector<1x128xf32>,
    %c35 = arith.constant 35 : index
    %c0_3 = arith.constant 0 : index
    %4 = vector.load %arg6[%c35, %c0_3] : memref<36x128xf32, #tpu.memory_space<vmem>>, vector<1x128xf32>
    tpu.vector_store %arg6[%c35, %c0_3], %0 {strides = array<i32>} : memref<36x128xf32, #tpu.memory_space<vmem>>, vector<1x128xf32>,
    %c0_4 = arith.constant 0 : index
    %c0_5 = arith.constant 0 : index
    %c0_6 = arith.constant 0 : index
    %5 = vector.load %arg1[%c0_4, %c0_5, %c0_6] : memref<2x16x64xf32, #tpu.memory_space<vmem>>, vector<2x16x64xf32>
    %6 = vector.extract_strided_slice %5 {offsets = [0, 0, 0], sizes = [1, 16, 64], strides = [1, 1, 1]} : vector<2x16x64xf32> to vector<1x16x64xf32>
    %7 = vector.shape_cast %6 : vector<1x16x64xf32> to vector<16x64xf32>
    %c1 = arith.constant 1 : index
    %c0_7 = arith.constant 0 : index
    %8 = vector.load %arg6[%c1, %c0_7] : memref<36x128xf32, #tpu.memory_space<vmem>>, vector<16x64xf32>
    tpu.vector_store %arg6[%c1, %c0_7], %7 {strides = array<i32>} : memref<36x128xf32, #tpu.memory_space<vmem>>, vector<16x64xf32>,
    %9 = vector.extract_strided_slice %5 {offsets = [1, 0, 0], sizes = [1, 16, 64], strides = [1, 1, 1]} : vector<2x16x64xf32> to vector<1x16x64xf32>
    %10 = vector.shape_cast %9 : vector<1x16x64xf32> to vector<16x64xf32>
    %c19 = arith.constant 19 : index
    %c0_8 = arith.constant 0 : index
    %11 = vector.load %arg6[%c19, %c0_8] : memref<36x128xf32, #tpu.memory_space<vmem>>, vector<16x64xf32>
    tpu.vector_store %arg6[%c19, %c0_8], %10 {strides = array<i32>} : memref<36x128xf32, #tpu.memory_space<vmem>>, vector<16x64xf32>,
    %c0_9 = arith.constant 0 : index
    %c0_10 = arith.constant 0 : index
    %c0_11 = arith.constant 0 : index
    %12 = vector.load %arg2[%c0_9, %c0_10, %c0_11] : memref<2x16x64xf32, #tpu.memory_space<vmem>>, vector<2x16x64xf32>
    %13 = vector.extract_strided_slice %12 {offsets = [0, 0, 0], sizes = [1, 16, 64], strides = [1, 1, 1]} : vector<2x16x64xf32> to vector<1x16x64xf32>
    %14 = vector.shape_cast %13 : vector<1x16x64xf32> to vector<16x64xf32>
    %c1_12 = arith.constant 1 : index
    %c64 = arith.constant 64 : index
    %15 = vector.load %arg6[%c1_12, %c64] : memref<36x128xf32, #tpu.memory_space<vmem>>, vector<16x64xf32>
    tpu.vector_store %arg6[%c1_12, %c64], %14 {strides = array<i32>} : memref<36x128xf32, #tpu.memory_space<vmem>>, vector<16x64xf32>,
    %16 = vector.extract_strided_slice %12 {offsets = [1, 0, 0], sizes = [1, 16, 64], strides = [1, 1, 1]} : vector<2x16x64xf32> to vector<1x16x64xf32>
    %17 = vector.shape_cast %16 : vector<1x16x64xf32> to vector<16x64xf32>
    %c19_13 = arith.constant 19 : index
    %c64_14 = arith.constant 64 : index
    %18 = vector.load %arg6[%c19_13, %c64_14] : memref<36x128xf32, #tpu.memory_space<vmem>>, vector<16x64xf32>
    tpu.vector_store %arg6[%c19_13, %c64_14], %17 {strides = array<i32>} : memref<36x128xf32, #tpu.memory_space<vmem>>, vector<16x64xf32>,
    %cst_15 = arith.constant 0.000000e+00 : f32
    %19 = vector.broadcast %cst_15 : f32 to vector<34x128xf32>
    %c0_16 = arith.constant 0 : index
    %c0_17 = arith.constant 0 : index
    %20 = vector.load %arg6[%c0_16, %c0_17] : memref<36x128xf32, #tpu.memory_space<vmem>>, vector<34x128xf32>
    %c0_18 = arith.constant 0 : index
    %c0_19 = arith.constant 0 : index
    %c0_20 = arith.constant 0 : index
    %21 = vector.load %arg3[%c0_18, %c0_19, %c0_20] : memref<3x128x128xf32, #tpu.memory_space<vmem>>, vector<1x128x128xf32>
    %22 = vector.shape_cast %21 : vector<1x128x128xf32> to vector<128x128xf32>
    %cst_21 = arith.constant dense<0.000000e+00> : vector<34x128xf32>
    %23 = tpu.matmul %20, %22, %cst_21 {dimension_numbers = #tpu.dot_dimension_numbers<[1], [0], [0], [1], [0, 0, 1, 1], [], []>} : vector<34x128xf32>, vector<128x128xf32>, vector<34x128xf32> -> vector<34x128xf32>
    %24 = arith.addf %19, %23 : vector<34x128xf32>
    %c1_22 = arith.constant 1 : index
    %c0_23 = arith.constant 0 : index
    %25 = vector.load %arg6[%c1_22, %c0_23] : memref<36x128xf32, #tpu.memory_space<vmem>>, vector<34x128xf32>
    %c1_24 = arith.constant 1 : index
    %c0_25 = arith.constant 0 : index
    %c0_26 = arith.constant 0 : index
    %26 = vector.load %arg3[%c1_24, %c0_25, %c0_26] : memref<3x128x128xf32, #tpu.memory_space<vmem>>, vector<1x128x128xf32>
    %27 = vector.shape_cast %26 : vector<1x128x128xf32> to vector<128x128xf32>
    %cst_27 = arith.constant dense<0.000000e+00> : vector<34x128xf32>
    %28 = tpu.matmul %25, %27, %cst_27 {dimension_numbers = #tpu.dot_dimension_numbers<[1], [0], [0], [1], [0, 0, 1, 1], [], []>} : vector<34x128xf32>, vector<128x128xf32>, vector<34x128xf32> -> vector<34x128xf32>
    %29 = arith.addf %24, %28 : vector<34x128xf32>
    %c2 = arith.constant 2 : index
    %c0_28 = arith.constant 0 : index
    %30 = vector.load %arg6[%c2, %c0_28] : memref<36x128xf32, #tpu.memory_space<vmem>>, vector<34x128xf32>
    %c2_29 = arith.constant 2 : index
    %c0_30 = arith.constant 0 : index
    %c0_31 = arith.constant 0 : index
    %31 = vector.load %arg3[%c2_29, %c0_30, %c0_31] : memref<3x128x128xf32, #tpu.memory_space<vmem>>, vector<1x128x128xf32>
    %32 = vector.shape_cast %31 : vector<1x128x128xf32> to vector<128x128xf32>
    %cst_32 = arith.constant dense<0.000000e+00> : vector<34x128xf32>
    %33 = tpu.matmul %30, %32, %cst_32 {dimension_numbers = #tpu.dot_dimension_numbers<[1], [0], [0], [1], [0, 0, 1, 1], [], []>} : vector<34x128xf32>, vector<128x128xf32>, vector<34x128xf32> -> vector<34x128xf32>
    %34 = arith.addf %29, %33 : vector<34x128xf32>
    %cst_33 = arith.constant 0.000000e+00 : f32
    %35 = vector.broadcast %cst_33 : f32 to vector<1x128xf32>
    %cst_34 = arith.constant 0.000000e+00 : f32
    %36 = vector.broadcast %cst_34 : f32 to vector<1x128xf32>
    %37 = vector.extract_strided_slice %34 {offsets = [0, 0], sizes = [16, 128], strides = [1, 1]} : vector<34x128xf32> to vector<16x128xf32>
    %c0_35 = arith.constant 0 : index
    %c0_36 = arith.constant 0 : index
    %c0_37 = arith.constant 0 : index
    %38 = vector.load %arg4[%c0_35, %c0_36, %c0_37] : memref<2x16x128xf32, #tpu.memory_space<vmem>>, vector<1x16x128xf32>
    %39 = vector.shape_cast %38 : vector<1x16x128xf32> to vector<16x128xf32>
    %40 = vector.shape_cast %37 : vector<16x128xf32> to vector<1x16x128xf32>
    tpu.vector_store %arg4[%c0_35, %c0_36, %c0_37], %40 {strides = array<i32>} : memref<2x16x128xf32, #tpu.memory_space<vmem>>, vector<1x16x128xf32>,
    %cst_38 = arith.constant dense<0.000000e+00> : vector<128xf32>
    %41 = vector.multi_reduction <add>, %37, %cst_38 [0] : vector<16x128xf32> to vector<128xf32>
    %42 = vector.shape_cast %41 : vector<128xf32> to vector<1x128xf32>
    %43 = arith.addf %35, %42 : vector<1x128xf32>
    %44 = arith.mulf %37, %37 : vector<16x128xf32>
    %cst_39 = arith.constant dense<0.000000e+00> : vector<128xf32>
    %45 = vector.multi_reduction <add>, %44, %cst_39 [0] : vector<16x128xf32> to vector<128xf32>
    %46 = vector.shape_cast %45 : vector<128xf32> to vector<1x128xf32>
    %47 = arith.addf %36, %46 : vector<1x128xf32>
    %48 = vector.extract_strided_slice %34 {offsets = [18, 0], sizes = [16, 128], strides = [1, 1]} : vector<34x128xf32> to vector<16x128xf32>
    %c1_40 = arith.constant 1 : index
    %c0_41 = arith.constant 0 : index
    %c0_42 = arith.constant 0 : index
    %49 = vector.load %arg4[%c1_40, %c0_41, %c0_42] : memref<2x16x128xf32, #tpu.memory_space<vmem>>, vector<1x16x128xf32>
    %50 = vector.shape_cast %49 : vector<1x16x128xf32> to vector<16x128xf32>
    %51 = vector.shape_cast %48 : vector<16x128xf32> to vector<1x16x128xf32>
    tpu.vector_store %arg4[%c1_40, %c0_41, %c0_42], %51 {strides = array<i32>} : memref<2x16x128xf32, #tpu.memory_space<vmem>>, vector<1x16x128xf32>,
    %cst_43 = arith.constant dense<0.000000e+00> : vector<128xf32>
    %52 = vector.multi_reduction <add>, %48, %cst_43 [0] : vector<16x128xf32> to vector<128xf32>
    %53 = vector.shape_cast %52 : vector<128xf32> to vector<1x128xf32>
    %54 = arith.addf %43, %53 : vector<1x128xf32>
    %55 = arith.mulf %48, %48 : vector<16x128xf32>
    %cst_44 = arith.constant dense<0.000000e+00> : vector<128xf32>
    %56 = vector.multi_reduction <add>, %55, %cst_44 [0] : vector<16x128xf32> to vector<128xf32>
    %57 = vector.shape_cast %56 : vector<128xf32> to vector<1x128xf32>
    %58 = arith.addf %47, %57 : vector<1x128xf32>
    %c0_45 = arith.constant 0 : index
    %c0_46 = arith.constant 0 : index
    %c0_47 = arith.constant 0 : index
    %59 = vector.load %arg5[%c0_45, %c0_46, %c0_47] : memref<1x2x128xf32, #tpu.memory_space<vmem>>, vector<1x1x128xf32>
    %60 = vector.shape_cast %59 : vector<1x1x128xf32> to vector<1x128xf32>
    %61 = vector.shape_cast %54 : vector<1x128xf32> to vector<1x1x128xf32>
    tpu.vector_store %arg5[%c0_45, %c0_46, %c0_47], %61 {strides = array<i32>} : memref<1x2x128xf32, #tpu.memory_space<vmem>>, vector<1x1x128xf32>,
    %c0_48 = arith.constant 0 : index
    %c1_49 = arith.constant 1 : index
    %c0_50 = arith.constant 0 : index
    %62 = vector.load %arg5[%c0_48, %c1_49, %c0_50] : memref<1x2x128xf32, #tpu.memory_space<vmem>>, vector<1x1x128xf32>
    %63 = vector.shape_cast %62 : vector<1x1x128xf32> to vector<1x128xf32>
    %64 = vector.shape_cast %58 : vector<1x128xf32> to vector<1x1x128xf32>
    tpu.vector_store %arg5[%c0_48, %c1_49, %c0_50], %64 {strides = array<i32>} : memref<1x2x128xf32, #tpu.memory_space<vmem>>, vector<1x1x128xf32>,
    return
  }
  func.func @transform_0(%arg0: i32) -> (i32, i32, i32) {
    %c0_i32 = arith.constant 0 : i32
    %c0_i32_0 = arith.constant 0 : i32
    %c0_i32_1 = arith.constant 0 : i32
    return %arg0, %c0_i32, %c0_i32_0 : i32, i32, i32
  }
  func.func @transform_1(%arg0: i32) -> (i32, i32, i32) {
    %c0_i32 = arith.constant 0 : i32
    %c0_i32_0 = arith.constant 0 : i32
    %c0_i32_1 = arith.constant 0 : i32
    return %arg0, %c0_i32, %c0_i32_0 : i32, i32, i32
  }
  func.func @transform_2(%arg0: i32) -> (i32, i32, i32) {
    %c0_i32 = arith.constant 0 : i32
    %c0_i32_0 = arith.constant 0 : i32
    %c0_i32_1 = arith.constant 0 : i32
    %c0_i32_2 = arith.constant 0 : i32
    return %c0_i32, %c0_i32_0, %c0_i32_1 : i32, i32, i32
  }
  func.func @transform_3(%arg0: i32) -> (i32, i32, i32) {
    %c0_i32 = arith.constant 0 : i32
    %c0_i32_0 = arith.constant 0 : i32
    %c0_i32_1 = arith.constant 0 : i32
    return %arg0, %c0_i32, %c0_i32_0 : i32, i32, i32
  }
  func.func @transform_4(%arg0: i32) -> (i32, i32, i32) {
    %c0_i32 = arith.constant 0 : i32
    %c0_i32_0 = arith.constant 0 : i32
    %c0_i32_1 = arith.constant 0 : i32
    return %arg0, %c0_i32, %c0_i32_0 : i32, i32, i32
  }
}

module attributes {stable_mosaic.version = 11 : i64} {
  func.func @bn_relu_kernel(%arg0: i32, %arg1: memref<32x128xf32, #tpu.memory_space<vmem>>, %arg2: memref<1x128xf32, #tpu.memory_space<vmem>>, %arg3: memref<1x128xf32, #tpu.memory_space<vmem>>, %arg4: memref<32x128xf32, #tpu.memory_space<vmem>>) attributes {dimension_semantics = [#tpu.dimension_semantics<parallel>], iteration_bounds = array<i64: 1>, scalar_prefetch = 0 : i64, scratch_operands = 0 : i64, tpu.core_type = #tpu.core_type<tc>, window_params = [{transform_indices = @transform_0, window_bounds = array<i64: 32, 128>}, {pipeline_mode = #tpu.pipeline_mode<synchronous>, transform_indices = @transform_1, window_bounds = array<i64: 1, 128>}, {pipeline_mode = #tpu.pipeline_mode<synchronous>, transform_indices = @transform_2, window_bounds = array<i64: 1, 128>}, {transform_indices = @transform_3, window_bounds = array<i64: 32, 128>}]} {
    %c0 = arith.constant 0 : index
    %c0_0 = arith.constant 0 : index
    %0 = vector.load %arg1[%c0, %c0_0] : memref<32x128xf32, #tpu.memory_space<vmem>>, vector<32x128xf32>
    %c0_1 = arith.constant 0 : index
    %c0_2 = arith.constant 0 : index
    %1 = vector.load %arg2[%c0_1, %c0_2] : memref<1x128xf32, #tpu.memory_space<vmem>>, vector<1x128xf32>
    %2 = vector.broadcast %1 : vector<1x128xf32> to vector<32x128xf32>
    %3 = arith.mulf %0, %2 : vector<32x128xf32>
    %c0_3 = arith.constant 0 : index
    %c0_4 = arith.constant 0 : index
    %4 = vector.load %arg3[%c0_3, %c0_4] : memref<1x128xf32, #tpu.memory_space<vmem>>, vector<1x128xf32>
    %5 = vector.broadcast %4 : vector<1x128xf32> to vector<32x128xf32>
    %6 = arith.addf %3, %5 : vector<32x128xf32>
    %cst = arith.constant 0.000000e+00 : f32
    %7 = vector.broadcast %cst : f32 to vector<32x128xf32>
    %8 = arith.maximumf %6, %7 : vector<32x128xf32>
    %c0_5 = arith.constant 0 : index
    %c0_6 = arith.constant 0 : index
    %9 = vector.load %arg4[%c0_5, %c0_6] : memref<32x128xf32, #tpu.memory_space<vmem>>, vector<32x128xf32>
    tpu.vector_store %arg4[%c0_5, %c0_6], %8 {strides = array<i32>} : memref<32x128xf32, #tpu.memory_space<vmem>>, vector<32x128xf32>,
    return
  }
  func.func @transform_0(%arg0: i32) -> (i32, i32) {
    %c0_i32 = arith.constant 0 : i32
    %c0_i32_0 = arith.constant 0 : i32
    return %arg0, %c0_i32 : i32, i32
  }
  func.func @transform_1(%arg0: i32) -> (i32, i32) {
    %c0_i32 = arith.constant 0 : i32
    %c0_i32_0 = arith.constant 0 : i32
    %c0_i32_1 = arith.constant 0 : i32
    return %c0_i32, %c0_i32_0 : i32, i32
  }
  func.func @transform_2(%arg0: i32) -> (i32, i32) {
    %c0_i32 = arith.constant 0 : i32
    %c0_i32_0 = arith.constant 0 : i32
    %c0_i32_1 = arith.constant 0 : i32
    return %c0_i32, %c0_i32_0 : i32, i32
  }
  func.func @transform_3(%arg0: i32) -> (i32, i32) {
    %c0_i32 = arith.constant 0 : i32
    %c0_i32_0 = arith.constant 0 : i32
    return %arg0, %c0_i32 : i32, i32
  }
}

module attributes {stable_mosaic.version = 11 : i64} {
  func.func @kernel(%arg0: i32, %arg1: memref<2x16x128xf32, #tpu.memory_space<vmem>>, %arg2: memref<3x128x128xf32, #tpu.memory_space<vmem>>, %arg3: memref<1x128xf32, #tpu.memory_space<vmem>>, %arg4: memref<1x128xf32, #tpu.memory_space<vmem>>, %arg5: memref<2x16x128xf32, #tpu.memory_space<vmem>>, %arg6: memref<1x2x128xf32, #tpu.memory_space<vmem>>, %arg7: memref<36x128xf32, #tpu.memory_space<vmem>>) attributes {dimension_semantics = [#tpu.dimension_semantics<parallel>], iteration_bounds = array<i64: 1>, scalar_prefetch = 0 : i64, scratch_operands = 1 : i64, tpu.core_type = #tpu.core_type<tc>, window_params = [{transform_indices = @transform_0, window_bounds = array<i64: 2, 16, 128>}, {pipeline_mode = #tpu.pipeline_mode<synchronous>, transform_indices = @transform_1, window_bounds = array<i64: 3, 128, 128>}, {pipeline_mode = #tpu.pipeline_mode<synchronous>, transform_indices = @transform_2, window_bounds = array<i64: 1, 128>}, {pipeline_mode = #tpu.pipeline_mode<synchronous>, transform_indices = @transform_3, window_bounds = array<i64: 1, 128>}, {transform_indices = @transform_4, window_bounds = array<i64: 2, 16, 128>}, {transform_indices = @transform_5, window_bounds = array<i64: 1, 2, 128>}]} {
    %cst = arith.constant 0.000000e+00 : f32
    %0 = vector.broadcast %cst : f32 to vector<1x128xf32>
    %c0 = arith.constant 0 : index
    %c0_0 = arith.constant 0 : index
    %1 = vector.load %arg7[%c0, %c0_0] : memref<36x128xf32, #tpu.memory_space<vmem>>, vector<1x128xf32>
    tpu.vector_store %arg7[%c0, %c0_0], %0 {strides = array<i32>} : memref<36x128xf32, #tpu.memory_space<vmem>>, vector<1x128xf32>,
    %c17 = arith.constant 17 : index
    %c0_1 = arith.constant 0 : index
    %2 = vector.load %arg7[%c17, %c0_1] : memref<36x128xf32, #tpu.memory_space<vmem>>, vector<1x128xf32>
    tpu.vector_store %arg7[%c17, %c0_1], %0 {strides = array<i32>} : memref<36x128xf32, #tpu.memory_space<vmem>>, vector<1x128xf32>,
    %c18 = arith.constant 18 : index
    %c0_2 = arith.constant 0 : index
    %3 = vector.load %arg7[%c18, %c0_2] : memref<36x128xf32, #tpu.memory_space<vmem>>, vector<1x128xf32>
    tpu.vector_store %arg7[%c18, %c0_2], %0 {strides = array<i32>} : memref<36x128xf32, #tpu.memory_space<vmem>>, vector<1x128xf32>,
    %c35 = arith.constant 35 : index
    %c0_3 = arith.constant 0 : index
    %4 = vector.load %arg7[%c35, %c0_3] : memref<36x128xf32, #tpu.memory_space<vmem>>, vector<1x128xf32>
    tpu.vector_store %arg7[%c35, %c0_3], %0 {strides = array<i32>} : memref<36x128xf32, #tpu.memory_space<vmem>>, vector<1x128xf32>,
    %c0_4 = arith.constant 0 : index
    %c0_5 = arith.constant 0 : index
    %c0_6 = arith.constant 0 : index
    %5 = vector.load %arg1[%c0_4, %c0_5, %c0_6] : memref<2x16x128xf32, #tpu.memory_space<vmem>>, vector<2x16x128xf32>
    %c0_7 = arith.constant 0 : index
    %c0_8 = arith.constant 0 : index
    %6 = vector.load %arg3[%c0_7, %c0_8] : memref<1x128xf32, #tpu.memory_space<vmem>>, vector<1x128xf32>
    %7 = vector.shape_cast %6 : vector<1x128xf32> to vector<1x1x128xf32>
    %8 = vector.broadcast %7 : vector<1x1x128xf32> to vector<2x16x128xf32>
    %9 = arith.mulf %5, %8 : vector<2x16x128xf32>
    %c0_9 = arith.constant 0 : index
    %c0_10 = arith.constant 0 : index
    %10 = vector.load %arg4[%c0_9, %c0_10] : memref<1x128xf32, #tpu.memory_space<vmem>>, vector<1x128xf32>
    %11 = vector.shape_cast %10 : vector<1x128xf32> to vector<1x1x128xf32>
    %12 = vector.broadcast %11 : vector<1x1x128xf32> to vector<2x16x128xf32>
    %13 = arith.addf %9, %12 : vector<2x16x128xf32>
    %cst_11 = arith.constant 0.000000e+00 : f32
    %14 = vector.broadcast %cst_11 : f32 to vector<2x16x128xf32>
    %15 = arith.maximumf %13, %14 : vector<2x16x128xf32>
    %16 = vector.extract_strided_slice %15 {offsets = [0, 0, 0], sizes = [1, 16, 128], strides = [1, 1, 1]} : vector<2x16x128xf32> to vector<1x16x128xf32>
    %17 = vector.shape_cast %16 : vector<1x16x128xf32> to vector<16x128xf32>
    %c1 = arith.constant 1 : index
    %c0_12 = arith.constant 0 : index
    %18 = vector.load %arg7[%c1, %c0_12] : memref<36x128xf32, #tpu.memory_space<vmem>>, vector<16x128xf32>
    tpu.vector_store %arg7[%c1, %c0_12], %17 {strides = array<i32>} : memref<36x128xf32, #tpu.memory_space<vmem>>, vector<16x128xf32>,
    %19 = vector.extract_strided_slice %15 {offsets = [1, 0, 0], sizes = [1, 16, 128], strides = [1, 1, 1]} : vector<2x16x128xf32> to vector<1x16x128xf32>
    %20 = vector.shape_cast %19 : vector<1x16x128xf32> to vector<16x128xf32>
    %c19 = arith.constant 19 : index
    %c0_13 = arith.constant 0 : index
    %21 = vector.load %arg7[%c19, %c0_13] : memref<36x128xf32, #tpu.memory_space<vmem>>, vector<16x128xf32>
    tpu.vector_store %arg7[%c19, %c0_13], %20 {strides = array<i32>} : memref<36x128xf32, #tpu.memory_space<vmem>>, vector<16x128xf32>,
    %cst_14 = arith.constant 0.000000e+00 : f32
    %22 = vector.broadcast %cst_14 : f32 to vector<34x128xf32>
    %c0_15 = arith.constant 0 : index
    %c0_16 = arith.constant 0 : index
    %23 = vector.load %arg7[%c0_15, %c0_16] : memref<36x128xf32, #tpu.memory_space<vmem>>, vector<34x128xf32>
    %c0_17 = arith.constant 0 : index
    %c0_18 = arith.constant 0 : index
    %c0_19 = arith.constant 0 : index
    %24 = vector.load %arg2[%c0_17, %c0_18, %c0_19] : memref<3x128x128xf32, #tpu.memory_space<vmem>>, vector<1x128x128xf32>
    %25 = vector.shape_cast %24 : vector<1x128x128xf32> to vector<128x128xf32>
    %cst_20 = arith.constant dense<0.000000e+00> : vector<34x128xf32>
    %26 = tpu.matmul %23, %25, %cst_20 {dimension_numbers = #tpu.dot_dimension_numbers<[1], [0], [0], [1], [0, 0, 1, 1], [], []>} : vector<34x128xf32>, vector<128x128xf32>, vector<34x128xf32> -> vector<34x128xf32>
    %27 = arith.addf %22, %26 : vector<34x128xf32>
    %c1_21 = arith.constant 1 : index
    %c0_22 = arith.constant 0 : index
    %28 = vector.load %arg7[%c1_21, %c0_22] : memref<36x128xf32, #tpu.memory_space<vmem>>, vector<34x128xf32>
    %c1_23 = arith.constant 1 : index
    %c0_24 = arith.constant 0 : index
    %c0_25 = arith.constant 0 : index
    %29 = vector.load %arg2[%c1_23, %c0_24, %c0_25] : memref<3x128x128xf32, #tpu.memory_space<vmem>>, vector<1x128x128xf32>
    %30 = vector.shape_cast %29 : vector<1x128x128xf32> to vector<128x128xf32>
    %cst_26 = arith.constant dense<0.000000e+00> : vector<34x128xf32>
    %31 = tpu.matmul %28, %30, %cst_26 {dimension_numbers = #tpu.dot_dimension_numbers<[1], [0], [0], [1], [0, 0, 1, 1], [], []>} : vector<34x128xf32>, vector<128x128xf32>, vector<34x128xf32> -> vector<34x128xf32>
    %32 = arith.addf %27, %31 : vector<34x128xf32>
    %c2 = arith.constant 2 : index
    %c0_27 = arith.constant 0 : index
    %33 = vector.load %arg7[%c2, %c0_27] : memref<36x128xf32, #tpu.memory_space<vmem>>, vector<34x128xf32>
    %c2_28 = arith.constant 2 : index
    %c0_29 = arith.constant 0 : index
    %c0_30 = arith.constant 0 : index
    %34 = vector.load %arg2[%c2_28, %c0_29, %c0_30] : memref<3x128x128xf32, #tpu.memory_space<vmem>>, vector<1x128x128xf32>
    %35 = vector.shape_cast %34 : vector<1x128x128xf32> to vector<128x128xf32>
    %cst_31 = arith.constant dense<0.000000e+00> : vector<34x128xf32>
    %36 = tpu.matmul %33, %35, %cst_31 {dimension_numbers = #tpu.dot_dimension_numbers<[1], [0], [0], [1], [0, 0, 1, 1], [], []>} : vector<34x128xf32>, vector<128x128xf32>, vector<34x128xf32> -> vector<34x128xf32>
    %37 = arith.addf %32, %36 : vector<34x128xf32>
    %cst_32 = arith.constant 0.000000e+00 : f32
    %38 = vector.broadcast %cst_32 : f32 to vector<1x128xf32>
    %cst_33 = arith.constant 0.000000e+00 : f32
    %39 = vector.broadcast %cst_33 : f32 to vector<1x128xf32>
    %40 = vector.extract_strided_slice %37 {offsets = [0, 0], sizes = [16, 128], strides = [1, 1]} : vector<34x128xf32> to vector<16x128xf32>
    %c0_34 = arith.constant 0 : index
    %c0_35 = arith.constant 0 : index
    %c0_36 = arith.constant 0 : index
    %41 = vector.load %arg5[%c0_34, %c0_35, %c0_36] : memref<2x16x128xf32, #tpu.memory_space<vmem>>, vector<1x16x128xf32>
    %42 = vector.shape_cast %41 : vector<1x16x128xf32> to vector<16x128xf32>
    %43 = vector.shape_cast %40 : vector<16x128xf32> to vector<1x16x128xf32>
    tpu.vector_store %arg5[%c0_34, %c0_35, %c0_36], %43 {strides = array<i32>} : memref<2x16x128xf32, #tpu.memory_space<vmem>>, vector<1x16x128xf32>,
    %cst_37 = arith.constant dense<0.000000e+00> : vector<128xf32>
    %44 = vector.multi_reduction <add>, %40, %cst_37 [0] : vector<16x128xf32> to vector<128xf32>
    %45 = vector.shape_cast %44 : vector<128xf32> to vector<1x128xf32>
    %46 = arith.addf %38, %45 : vector<1x128xf32>
    %47 = arith.mulf %40, %40 : vector<16x128xf32>
    %cst_38 = arith.constant dense<0.000000e+00> : vector<128xf32>
    %48 = vector.multi_reduction <add>, %47, %cst_38 [0] : vector<16x128xf32> to vector<128xf32>
    %49 = vector.shape_cast %48 : vector<128xf32> to vector<1x128xf32>
    %50 = arith.addf %39, %49 : vector<1x128xf32>
    %51 = vector.extract_strided_slice %37 {offsets = [18, 0], sizes = [16, 128], strides = [1, 1]} : vector<34x128xf32> to vector<16x128xf32>
    %c1_39 = arith.constant 1 : index
    %c0_40 = arith.constant 0 : index
    %c0_41 = arith.constant 0 : index
    %52 = vector.load %arg5[%c1_39, %c0_40, %c0_41] : memref<2x16x128xf32, #tpu.memory_space<vmem>>, vector<1x16x128xf32>
    %53 = vector.shape_cast %52 : vector<1x16x128xf32> to vector<16x128xf32>
    %54 = vector.shape_cast %51 : vector<16x128xf32> to vector<1x16x128xf32>
    tpu.vector_store %arg5[%c1_39, %c0_40, %c0_41], %54 {strides = array<i32>} : memref<2x16x128xf32, #tpu.memory_space<vmem>>, vector<1x16x128xf32>,
    %cst_42 = arith.constant dense<0.000000e+00> : vector<128xf32>
    %55 = vector.multi_reduction <add>, %51, %cst_42 [0] : vector<16x128xf32> to vector<128xf32>
    %56 = vector.shape_cast %55 : vector<128xf32> to vector<1x128xf32>
    %57 = arith.addf %46, %56 : vector<1x128xf32>
    %58 = arith.mulf %51, %51 : vector<16x128xf32>
    %cst_43 = arith.constant dense<0.000000e+00> : vector<128xf32>
    %59 = vector.multi_reduction <add>, %58, %cst_43 [0] : vector<16x128xf32> to vector<128xf32>
    %60 = vector.shape_cast %59 : vector<128xf32> to vector<1x128xf32>
    %61 = arith.addf %50, %60 : vector<1x128xf32>
    %c0_44 = arith.constant 0 : index
    %c0_45 = arith.constant 0 : index
    %c0_46 = arith.constant 0 : index
    %62 = vector.load %arg6[%c0_44, %c0_45, %c0_46] : memref<1x2x128xf32, #tpu.memory_space<vmem>>, vector<1x1x128xf32>
    %63 = vector.shape_cast %62 : vector<1x1x128xf32> to vector<1x128xf32>
    %64 = vector.shape_cast %57 : vector<1x128xf32> to vector<1x1x128xf32>
    tpu.vector_store %arg6[%c0_44, %c0_45, %c0_46], %64 {strides = array<i32>} : memref<1x2x128xf32, #tpu.memory_space<vmem>>, vector<1x1x128xf32>,
    %c0_47 = arith.constant 0 : index
    %c1_48 = arith.constant 1 : index
    %c0_49 = arith.constant 0 : index
    %65 = vector.load %arg6[%c0_47, %c1_48, %c0_49] : memref<1x2x128xf32, #tpu.memory_space<vmem>>, vector<1x1x128xf32>
    %66 = vector.shape_cast %65 : vector<1x1x128xf32> to vector<1x128xf32>
    %67 = vector.shape_cast %61 : vector<1x128xf32> to vector<1x1x128xf32>
    tpu.vector_store %arg6[%c0_47, %c1_48, %c0_49], %67 {strides = array<i32>} : memref<1x2x128xf32, #tpu.memory_space<vmem>>, vector<1x1x128xf32>,
    return
  }
  func.func @transform_0(%arg0: i32) -> (i32, i32, i32) {
    %c0_i32 = arith.constant 0 : i32
    %c0_i32_0 = arith.constant 0 : i32
    %c0_i32_1 = arith.constant 0 : i32
    return %arg0, %c0_i32, %c0_i32_0 : i32, i32, i32
  }
  func.func @transform_1(%arg0: i32) -> (i32, i32, i32) {
    %c0_i32 = arith.constant 0 : i32
    %c0_i32_0 = arith.constant 0 : i32
    %c0_i32_1 = arith.constant 0 : i32
    %c0_i32_2 = arith.constant 0 : i32
    return %c0_i32, %c0_i32_0, %c0_i32_1 : i32, i32, i32
  }
  func.func @transform_2(%arg0: i32) -> (i32, i32) {
    %c0_i32 = arith.constant 0 : i32
    %c0_i32_0 = arith.constant 0 : i32
    %c0_i32_1 = arith.constant 0 : i32
    return %c0_i32, %c0_i32_0 : i32, i32
  }
  func.func @transform_3(%arg0: i32) -> (i32, i32) {
    %c0_i32 = arith.constant 0 : i32
    %c0_i32_0 = arith.constant 0 : i32
    %c0_i32_1 = arith.constant 0 : i32
    return %c0_i32, %c0_i32_0 : i32, i32
  }
  func.func @transform_4(%arg0: i32) -> (i32, i32, i32) {
    %c0_i32 = arith.constant 0 : i32
    %c0_i32_0 = arith.constant 0 : i32
    %c0_i32_1 = arith.constant 0 : i32
    return %arg0, %c0_i32, %c0_i32_0 : i32, i32, i32
  }
  func.func @transform_5(%arg0: i32) -> (i32, i32, i32) {
    %c0_i32 = arith.constant 0 : i32
    %c0_i32_0 = arith.constant 0 : i32
    %c0_i32_1 = arith.constant 0 : i32
    return %arg0, %c0_i32, %c0_i32_0 : i32, i32, i32
  }
}

</mosaic_0001>

<llo_original>
// kernel: tile.28
$region0: #{tile.28}
  #allocation0 [shape = 's32[1]{0}', space=sflag, size = 0x4, scoped, tag = 'scoped memory for tile.28']
  %s0 = inlined_call_operand.vmem [shape: f32[8], index: 0, kind: input, shape index: {}]
  %s1 = inlined_call_operand.vmem [shape: f32[16,8], index: 1, kind: output, shape index: {}]
  // Predicated region
  $region2: #{tile.28} parent=0 // pred_check
    _
  $region3: #{tile.28} parent=0 // pred_check_branch
    %3 = sbr.rel (0) target = $region5
  $region4: #{tile.28} parent=0 // pred_region
    _
  $region5: #{tile.28} parent=0 // pred_fallthru
    _
  %v4 = vld [vmem:[%s0] ss:$0 sm:$0xff]
  %5 = vst [vmem:[%s1] sm:$0xff] %v4
  %s6 = scalar_lea.vmem %s1, 8
  %7 = vst [vmem:[%s6] sm:$0xff] %v4

// kernel: tile.29
$region0: #{tile.29}
  %s0 = inlined_call_operand.vmem [shape: f32[16,8], index: 0, kind: input, shape index: {}]
  %s1 = inlined_call_operand.vmem [shape: f32[1,128], index: 1, kind: output, shape index: {}]
  $region1: #{tile.29} parent=0
    #allocation0 [shape = 'u8[4096]{0}', space=vmem, size = 0x1000, scoped, tag = 'scoped mem for output reshape']
    %v2 = vld [vmem:[%s0] sm:$0x1]
    %vm3 = vcmask 64512
    %4 = vst.msk [vmem:[#allocation0] sm:$0x1] %vm3, %v2
    %s5 = scalar_lea.vmem %s0, 15
    %v6 = vld [vmem:[%s5] sm:$0x1]
    %7 = vrot.lane.b32.xlu0 %v6, 120
    %v8 = vpop.permute.xlu0 %7
    %vm9 = vcmask 1048512
    %10 = vst.msk [vmem:[#allocation0] sm:$0x1] %vm9, %v8
    %s11 = scalar_lea.vmem %s0, 14
    %v12 = vld [vmem:[%s11] sm:$0x1]
    %13 = vrot.lane.b32.xlu0 %v12, 112
    %v14 = vpop.permute.xlu0 %13
    %vm15 = vcmask 982912
    %16 = vst.msk [vmem:[#allocation0] sm:$0x1] %vm15, %v14
    %s17 = scalar_lea.vmem %s0, 13
    %v18 = vld [vmem:[%s17] sm:$0x1]
    %19 = vrot.lane.b32.xlu0 %v18, 104
    %v20 = vpop.permute.xlu0 %19
    %vm21 = vcmask 917312
    %22 = vst.msk [vmem:[#allocation0] sm:$0x1] %vm21, %v20
    %s23 = scalar_lea.vmem %s0, 12
    %v24 = vld [vmem:[%s23] sm:$0x1]
    %25 = vrot.lane.b32.xlu0 %v24, 96
    %v26 = vpop.permute.xlu0 %25
    %vm27 = vcmask 851712
    %28 = vst.msk [vmem:[#allocation0] sm:$0x1] %vm27, %v26
    %s29 = scalar_lea.vmem %s0, 11
    %v30 = vld [vmem:[%s29] sm:$0x1]
    %31 = vrot.lane.b32.xlu0 %v30, 88
    %v32 = vpop.permute.xlu0 %31
    %vm33 = vcmask 786112
    %34 = vst.msk [vmem:[#allocation0] sm:$0x1] %vm33, %v32
    %s35 = scalar_lea.vmem %s0, 10
    %v36 = vld [vmem:[%s35] sm:$0x1]
    %37 = vrot.lane.b32.xlu0 %v36, 80
    %v38 = vpop.permute.xlu0 %37
    %vm39 = vcmask 720512
    %40 = vst.msk [vmem:[#allocation0] sm:$0x1] %vm39, %v38
    %s41 = scalar_lea.vmem %s0, 9
    %v42 = vld [vmem:[%s41] sm:$0x1]
    %43 = vrot.lane.b32.xlu0 %v42, 72
    %v44 = vpop.permute.xlu0 %43
    %vm45 = vcmask 654912
    %46 = vst.msk [vmem:[#allocation0] sm:$0x1] %vm45, %v44
    %s47 = scalar_lea.vmem %s0, 8
    %v48 = vld [vmem:[%s47] sm:$0x1]
    %49 = vrot.lane.b32.xlu0 %v48, 64
    %v50 = vpop.permute.xlu0 %49
    %vm51 = vcmask 589312
    %52 = vst.msk [vmem:[#allocation0] sm:$0x1] %vm51, %v50
    %s53 = scalar_lea.vmem %s0, 7
    %v54 = vld [vmem:[%s53] sm:$0x1]
    %55 = vrot.lane.b32.xlu0 %v54, 56
    %v56 = vpop.permute.xlu0 %55
    %vm57 = vcmask 523712
    %58 = vst.msk [vmem:[#allocation0] sm:$0x1] %vm57, %v56
    %s59 = scalar_lea.vmem %s0, 6
    %v60 = vld [vmem:[%s59] sm:$0x1]
    %61 = vrot.lane.b32.xlu0 %v60, 48
    %v62 = vpop.permute.xlu0 %61
    %vm63 = vcmask 458112
    %64 = vst.msk [vmem:[#allocation0] sm:$0x1] %vm63, %v62
    %s65 = scalar_lea.vmem %s0, 5
    %v66 = vld [vmem:[%s65] sm:$0x1]
    %67 = vrot.lane.b32.xlu0 %v66, 40
    %v68 = vpop.permute.xlu0 %67
    %vm69 = vcmask 392512
    %70 = vst.msk [vmem:[#allocation0] sm:$0x1] %vm69, %v68
    %s71 = scalar_lea.vmem %s0, 4
    %v72 = vld [vmem:[%s71] sm:$0x1]
    %73 = vrot.lane.b32.xlu0 %v72, 32
    %v74 = vpop.permute.xlu0 %73
    %vm75 = vcmask 326912
    %76 = vst.msk [vmem:[#allocation0] sm:$0x1] %vm75, %v74
    %s77 = scalar_lea.vmem %s0, 3
    %v78 = vld [vmem:[%s77] sm:$0x1]
    %79 = vrot.lane.b32.xlu0 %v78, 24
    %v80 = vpop.permute.xlu0 %79
    %vm81 = vcmask 261312
    %82 = vst.msk [vmem:[#allocation0] sm:$0x1] %vm81, %v80
    %s83 = scalar_lea.vmem %s0, 2
    %v84 = vld [vmem:[%s83] sm:$0x1]
    %85 = vrot.lane.b32.xlu0 %v84, 16
    %v86 = vpop.permute.xlu0 %85
    %vm87 = vcmask 195712
    %88 = vst.msk [vmem:[#allocation0] sm:$0x1] %vm87, %v86
    %s89 = scalar_lea.vmem %s0, 1
    %v90 = vld [vmem:[%s89] sm:$0x1]
    %91 = vrot.lane.b32.xlu0 %v90, 8
    %v92 = vpop.permute.xlu0 %91
    %vm93 = vcmask 130112
    %94 = vst.msk [vmem:[#allocation0] sm:$0x1] %vm93, %v92
    %s96 = sshllo.u32 0, 1
    %v98 = vld [vmem:[#allocation0] sm:%s96]
    %s99 = sshllo.u32 0, 1
    %100 = vst [vmem:[%s1] sm:%s99] %v98

// kernel: up_forward.5
$region0: #{up_forward.5}
  #allocation0 [shape = 'u32[]', space=smem, size = 0x4, offset = 0x4, fixed_abs, tag = 'smem constant byte address 0x4 - core index']
  #allocation1 [shape = 'u32[144,128]{1,0:T(1,128)}', space=vmem, size = 0x12000, scoped, tag = 'internal scratch']
  %s0 = inlined_call_operand.vmem [shape: f32[32,128], index: 0, kind: input, shape index: {}]
  %s1 = inlined_call_operand.vmem [shape: f32[1,128], index: 1, kind: input, shape index: {}]
  %s2 = inlined_call_operand.vmem [shape: f32[1,128], index: 2, kind: input, shape index: {}]
  %s3 = inlined_call_operand.vmem [shape: f32[32,128], index: 3, kind: output, shape index: {}]
  %s4 = sld [smem:[#allocation0]]
  $region22: #{up_forward.5} parent=0
    _
  %s6 = ssub.s32 1, %s4
  %s7 = scalar_select 0, %s6, %s4
  // Predicated region
  $region2: #{up_forward.5} parent=0 // pred_check
    _
  $region3: #{up_forward.5} parent=0 // pred_check_branch
    %9 = sbr.rel (0) target = $region5
  $region4: #{up_forward.5} parent=0 // pred_region
    _
  $region5: #{up_forward.5} parent=0 // pred_fallthru
    _
  // Predicated region
  $region6: #{up_forward.5} parent=0 // pred_check
    _
  $region7: #{up_forward.5} parent=0 // pred_check_branch
    %11 = sbr.rel (0) target = $region9
  $region8: #{up_forward.5} parent=0 // pred_region
    _
  $region9: #{up_forward.5} parent=0 // pred_fallthru
    _
  // Predicated region
  $region10: #{up_forward.5} parent=0 // pred_check
    _
  $region11: #{up_forward.5} parent=0 // pred_check_branch
    %13 = sbr.rel (0) target = $region13
  $region12: #{up_forward.5} parent=0 // pred_region
    _
  $region13: #{up_forward.5} parent=0 // pred_fallthru
    _
  %v14 = vld [vmem:[%s0] sm:$0xff]
  %v15 = vld [vmem:[%s0 + $0x8] sm:$0xff]
  %v16 = vld [vmem:[%s0 + $0x10] sm:$0xff]
  %v17 = vld [vmem:[%s0 + $0x18] sm:$0xff]
  %v18 = vld [vmem:[%s1] sm:$0x1]
  %v20 = vlaneseq
  %v21 = vshrl.u32 %v20, 7
  %v22 = vsub.s32 0, %v21
  %v23 = vrot.slane %v18, %v22
  %v25 = vmul.f32 %v14, %v23
  %v26 = vmul.f32 %v15, %v23
  %v27 = vmul.f32 %v16, %v23
  %v28 = vmul.f32 %v17, %v23
  %v29 = vld [vmem:[%s2] sm:$0x1]
  %v31 = vlaneseq
  %v32 = vshrl.u32 %v31, 7
  %v33 = vsub.s32 0, %v32
  %v34 = vrot.slane %v29, %v33
  %v36 = vadd.f32 %v25, %v34
  %v37 = vadd.f32 %v26, %v34
  %v38 = vadd.f32 %v27, %v34
  %v39 = vadd.f32 %v28, %v34
  %v40 = vmax.f32 %v36, 0.0
  %v41 = vmax.f32 %v37, 0.0
  %v42 = vmax.f32 %v38, 0.0
  %v43 = vmax.f32 %v39, 0.0
  %44 = vst [vmem:[%s3] sm:$0xff] %v40
  %45 = vst [vmem:[%s3 + $0x8] sm:$0xff] %v41
  %46 = vst [vmem:[%s3 + $0x10] sm:$0xff] %v42
  %47 = vst [vmem:[%s3 + $0x18] sm:$0xff] %v43
  // Predicated region
  $region14: #{up_forward.5} parent=0 // pred_check
    _
  $region15: #{up_forward.5} parent=0 // pred_check_branch
    %49 = sbr.rel (0) target = $region17
  $region16: #{up_forward.5} parent=0 // pred_region
    _
  $region17: #{up_forward.5} parent=0 // pred_fallthru
    _
  // Predicated region
  $region18: #{up_forward.5} parent=0 // pred_check
    _
  $region19: #{up_forward.5} parent=0 // pred_check_branch
    %51 = sbr.rel (0) target = $region21
  $region20: #{up_forward.5} parent=0 // pred_region
    _
  $region21: #{up_forward.5} parent=0 // pred_fallthru
    _

// kernel: up_forward.4
$region0: #{up_forward.4}
  #allocation0 [shape = 'u32[]', space=smem, size = 0x4, offset = 0x4, fixed_abs, tag = 'smem constant byte address 0x4 - core index']
  #allocation1 [shape = 'u32[144,128]{1,0:T(1,128)}', space=vmem, size = 0x12000, scoped, tag = 'internal scratch']
  #allocation2 [shape = 'f32[36,128]{1,0:T(8,128)}', space=vmem, size = 0x5000, scoped, tag = 'scratch operand']
  %s0 = inlined_call_operand.vmem [shape: f32[2,16,128], index: 0, kind: input, shape index: {}]
  %s1 = inlined_call_operand.vmem [shape: f32[3,128,128], index: 1, kind: input, shape index: {}]
  %s2 = inlined_call_operand.vmem [shape: f32[1,128], index: 2, kind: input, shape index: {}]
  %s3 = inlined_call_operand.vmem [shape: f32[1,128], index: 3, kind: input, shape index: {}]
  %s4 = inlined_call_operand.vmem [shape: f32[2,16,128], index: 4, kind: output, shape index: {0}]
  %s5 = inlined_call_operand.vmem [shape: f32[1,2,128], index: 5, kind: output, shape index: {1}]
  %6 = xla_tuple %s4, %s5
  %s7 = sld [smem:[#allocation0]]
  $region34: #{up_forward.4} parent=0
    _
  %s9 = ssub.s32 1, %s7
  %s10 = scalar_select 0, %s9, %s7
  // Predicated region
  $region2: #{up_forward.4} parent=0 // pred_check
    _
  $region3: #{up_forward.4} parent=0 // pred_check_branch
    %12 = sbr.rel (0) target = $region5
  $region4: #{up_forward.4} parent=0 // pred_region
    _
  $region5: #{up_forward.4} parent=0 // pred_fallthru
    _
  // Predicated region
  $region6: #{up_forward.4} parent=0 // pred_check
    _
  $region7: #{up_forward.4} parent=0 // pred_check_branch
    %14 = sbr.rel (0) target = $region9
  $region8: #{up_forward.4} parent=0 // pred_region
    _
  $region9: #{up_forward.4} parent=0 // pred_fallthru
    _
  // Predicated region
  $region10: #{up_forward.4} parent=0 // pred_check
    _
  $region11: #{up_forward.4} parent=0 // pred_check_branch
    %16 = sbr.rel (0) target = $region13
  $region12: #{up_forward.4} parent=0 // pred_region
    _
  $region13: #{up_forward.4} parent=0 // pred_fallthru
    _
  // Predicated region
  $region14: #{up_forward.4} parent=0 // pred_check
    _
  $region15: #{up_forward.4} parent=0 // pred_check_branch
    %18 = sbr.rel (0) target = $region17
  $region16: #{up_forward.4} parent=0 // pred_region
    _
  $region17: #{up_forward.4} parent=0 // pred_fallthru
    _
  %19 = vst [vmem:[#allocation2] sm:$0x1] 0.0
  %20 = vst [vmem:[#allocation2 + $0x11] sm:$0x1] 0.0
  %21 = vst [vmem:[#allocation2 + $0x12] sm:$0x1] 0.0
  %22 = vst [vmem:[#allocation2 + $0x23] sm:$0x1] 0.0
  %v23 = vld [vmem:[%s0] sm:$0xff]
  %v24 = vld [vmem:[%s0 + $0x8] sm:$0xff]
  %v25 = vld [vmem:[%s0 + $0x10] sm:$0xff]
  %v26 = vld [vmem:[%s0 + $0x18] sm:$0xff]
  %v27 = vld [vmem:[%s2] sm:$0x1]
  %v29 = vlaneseq
  %v30 = vshrl.u32 %v29, 7
  %v31 = vsub.s32 0, %v30
  %v32 = vrot.slane %v27, %v31
  %v34 = vmul.f32 %v23, %v32
  %v35 = vmul.f32 %v24, %v32
  %v36 = vmul.f32 %v25, %v32
  %v37 = vmul.f32 %v26, %v32
  %v38 = vld [vmem:[%s3] sm:$0x1]
  %v40 = vlaneseq
  %v41 = vshrl.u32 %v40, 7
  %v42 = vsub.s32 0, %v41
  %v43 = vrot.slane %v38, %v42
  %v45 = vadd.f32 %v34, %v43
  %v46 = vadd.f32 %v35, %v43
  %v47 = vadd.f32 %v36, %v43
  %v48 = vadd.f32 %v37, %v43
  %v49 = vmax.f32 %v45, 0.0
  %v50 = vmax.f32 %v46, 0.0
  %v51 = vmax.f32 %v47, 0.0
  %v52 = vmax.f32 %v48, 0.0
  %53 = vst [vmem:[#allocation2 + $0x1] sm:$0xff] %v49
  %54 = vst [vmem:[#allocation2 + $0x9] sm:$0xff] %v50
  %55 = vst [vmem:[#allocation2 + $0x13] sm:$0xff] %v51
  %56 = vst [vmem:[#allocation2 + $0x1b] sm:$0xff] %v52
  %v57 = vld [vmem:[#allocation2] sm:$0xff]
  %v58 = vld [vmem:[#allocation2 + $0x8] sm:$0xff]
  %v59 = vld [vmem:[#allocation2 + $0x10] sm:$0xff]
  %v60 = vld [vmem:[#allocation2 + $0x18] sm:$0xff]
  %v61 = vld [vmem:[#allocation2 + $0x20] sm:$0x3]
  %v62 = vld [vmem:[%s1] sm:$0xff]
  %v63 = vld [vmem:[%s1 + $0x8] sm:$0xff]
  %v64 = vld [vmem:[%s1 + $0x10] sm:$0xff]
  %v65 = vld [vmem:[%s1 + $0x18] sm:$0xff]
  %v66 = vld [vmem:[%s1 + $0x20] sm:$0xff]
  %v67 = vld [vmem:[%s1 + $0x28] sm:$0xff]
  %v68 = vld [vmem:[%s1 + $0x30] sm:$0xff]
  %v69 = vld [vmem:[%s1 + $0x38] sm:$0xff]
  %v70 = vld [vmem:[%s1 + $0x40] sm:$0xff]
  %v71 = vld [vmem:[%s1 + $0x48] sm:$0xff]
  %v72 = vld [vmem:[%s1 + $0x50] sm:$0xff]
  %v73 = vld [vmem:[%s1 + $0x58] sm:$0xff]
  %v74 = vld [vmem:[%s1 + $0x60] sm:$0xff]
  %v75 = vld [vmem:[%s1 + $0x68] sm:$0xff]
  %v76 = vld [vmem:[%s1 + $0x70] sm:$0xff]
  %v77 = vld [vmem:[%s1 + $0x78] sm:$0xff]
  %v78 = vld [vmem:[#allocation2 + $0x1] sm:$0xff]
  %v79 = vld [vmem:[#allocation2 + $0x9] sm:$0xff]
  %v80 = vld [vmem:[#allocation2 + $0x11] sm:$0xff]
  %v81 = vld [vmem:[#allocation2 + $0x19] sm:$0xff]
  %v82 = vld [vmem:[#allocation2 + $0x21] sm:$0x3]
  %s83 = scalar_lea.vmem %s1, 128
  %v84 = vld [vmem:[%s83] sm:$0xff]
  %v85 = vld [vmem:[%s83 + $0x8] sm:$0xff]
  %v86 = vld [vmem:[%s83 + $0x10] sm:$0xff]
  %v87 = vld [vmem:[%s83 + $0x18] sm:$0xff]
  %v88 = vld [vmem:[%s83 + $0x20] sm:$0xff]
  %v89 = vld [vmem:[%s83 + $0x28] sm:$0xff]
  %v90 = vld [vmem:[%s83 + $0x30] sm:$0xff]
  %v91 = vld [vmem:[%s83 + $0x38] sm:$0xff]
  %v92 = vld [vmem:[%s83 + $0x40] sm:$0xff]
  %v93 = vld [vmem:[%s83 + $0x48] sm:$0xff]
  %v94 = vld [vmem:[%s83 + $0x50] sm:$0xff]
  %v95 = vld [vmem:[%s83 + $0x58] sm:$0xff]
  %v96 = vld [vmem:[%s83 + $0x60] sm:$0xff]
  %v97 = vld [vmem:[%s83 + $0x68] sm:$0xff]
  %v98 = vld [vmem:[%s83 + $0x70] sm:$0xff]
  %v99 = vld [vmem:[%s83 + $0x78] sm:$0xff]
  %100 = vmatprep.subr.mxu0 0.0
  %101 = vmatpush1.msra.mxu0 %v84
  %102 = vmatprep.subr.mxu0 0.0
  %103 = vmatpush1.msra.mxu0 %v85
  %104 = vmatprep.subr.mxu0 0.0
  %105 = vmatpush1.msra.mxu0 %v86
  %106 = vmatprep.subr.mxu0 0.0
  %107 = vmatpush1.msra.mxu0 %v87
  %108 = vmatprep.subr.mxu0 0.0
  %109 = vmatpush1.msra.mxu0 %v88
  %110 = vmatprep.subr.mxu0 0.0
  %111 = vmatpush1.msra.mxu0 %v89
  %112 = vmatprep.subr.mxu0 0.0
  %113 = vmatpush1.msra.mxu0 %v90
  %114 = vmatprep.subr.mxu0 0.0
  %115 = vmatpush1.msra.mxu0 %v91
  %116 = vmatprep.subr.mxu0 0.0
  %117 = vmatpush1.msra.mxu0 %v92
  %118 = vmatprep.subr.mxu0 0.0
  %119 = vmatpush1.msra.mxu0 %v93
  %120 = vmatprep.subr.mxu0 0.0
  %121 = vmatpush1.msra.mxu0 %v94
  %122 = vmatprep.subr.mxu0 0.0
  %123 = vmatpush1.msra.mxu0 %v95
  %124 = vmatprep.subr.mxu0 0.0
  %125 = vmatpush1.msra.mxu0 %v96
  %126 = vmatprep.subr.mxu0 0.0
  %127 = vmatpush1.msra.mxu0 %v97
  %128 = vmatprep.subr.mxu0 0.0
  %129 = vmatpush1.msra.mxu0 %v98
  %130 = vmatprep.subr.mxu0 0.0
  %131 = vmatpush1.msra.mxu0 %v99
  %132 = vmatprep.subr.mxu0 0.0
  %133 = vmatpush1.msra.mxu0 0.0
  %134 = vmatprep.subr.mxu0 0.0
  %135 = vmatpush1.msra.mxu0 0.0
  %136 = vmatprep.subr.mxu0 0.0
  %137 = vmatpush1.msra.mxu0 0.0
  %138 = vmatprep.subr.mxu0 0.0
  %139 = vmatpush1.msra.mxu0 0.0
  %140 = vmatprep.subr.mxu0 0.0
  %141 = vmatpush1.msra.mxu0 0.0
  %142 = vmatprep.subr.mxu0 0.0
  %143 = vmatpush1.msra.mxu0 0.0
  %144 = vmatprep.subr.mxu0 0.0
  %145 = vmatpush1.msra.mxu0 0.0
  %146 = vmatprep.subr.mxu0 0.0
  %147 = vmatpush1.msra.mxu0 0.0
  %148 = vmatprep.subr.mxu0 0.0
  %149 = vmatpush1.msra.mxu0 0.0
  %150 = vmatprep.subr.mxu0 0.0
  %151 = vmatpush1.msra.mxu0 0.0
  %152 = vmatprep.subr.mxu0 0.0
  %153 = vmatpush1.msra.mxu0 0.0
  %154 = vmatprep.subr.mxu0 0.0
  %155 = vmatpush1.msra.mxu0 0.0
  %156 = vmatprep.subr.mxu0 0.0
  %157 = vmatpush1.msra.mxu0 0.0
  %158 = vmatprep.subr.mxu0 0.0
  %159 = vmatpush1.msra.mxu0 0.0
  %160 = vmatprep.subr.mxu0 0.0
  %161 = vmatpush1.msra.mxu0 0.0
  %162 = vmatprep.subr.mxu0 0.0
  %163 = vmatpush1.msra.mxu0 0.0
  %164 = vmatprep.mubr.f32.mxu0 0.0
  %165 = vmatmul.mubr.f32.gmra.mrb[0].mxu0 %v78
  %v166 = vpop.f32.mrb[0].mxu0
  %v167 = vadd.f32 0.0, %v166
  %v168 = vpop.f32.mrb[0].mxu0
  %169 = vmatprep.mubr.f32.mxu0 0.0
  %170 = vmatmul.mubr.f32.gmra.mrb[0].mxu0 %v79
  %v171 = vpop.f32.mrb[0].mxu0
  %v172 = vadd.f32 0.0, %v171
  %v173 = vpop.f32.mrb[0].mxu0
  %174 = vmatprep.mubr.f32.mxu0 0.0
  %175 = vmatmul.mubr.f32.gmra.mrb[0].mxu0 %v80
  %v176 = vpop.f32.mrb[0].mxu0
  %v177 = vadd.f32 0.0, %v176
  %v178 = vpop.f32.mrb[0].mxu0
  %179 = vmatprep.mubr.f32.mxu0 0.0
  %180 = vmatmul.mubr.f32.gmra.mrb[0].mxu0 %v81
  %v181 = vpop.f32.mrb[0].mxu0
  %v182 = vadd.f32 0.0, %v181
  %v183 = vpop.f32.mrb[0].mxu0
  %184 = vmatprep.mubr.f32.mxu0 0.0
  %185 = vmatmul.mubr.f32.gmra.mrb[0].mxu0 %v82
  %v186 = vpop.f32.mrb[0].mxu0
  %v187 = vadd.f32 0.0, %v186
  %v188 = vpop.f32.mrb[0].mxu0
  %189 = vdwg.mxu0
  %190 = vmatprep.subr.mxu0 0.0
  %191 = vmatpush1.msra.mxu0 %v62
  %192 = vmatprep.subr.mxu0 0.0
  %193 = vmatpush1.msra.mxu0 %v63
  %194 = vmatprep.subr.mxu0 0.0
  %195 = vmatpush1.msra.mxu0 %v64
  %196 = vmatprep.subr.mxu0 0.0
  %197 = vmatpush1.msra.mxu0 %v65
  %198 = vmatprep.subr.mxu0 0.0
  %199 = vmatpush1.msra.mxu0 %v66
  %200 = vmatprep.subr.mxu0 0.0
  %201 = vmatpush1.msra.mxu0 %v67
  %202 = vmatprep.subr.mxu0 0.0
  %203 = vmatpush1.msra.mxu0 %v68
  %204 = vmatprep.subr.mxu0 0.0
  %205 = vmatpush1.msra.mxu0 %v69
  %206 = vmatprep.subr.mxu0 0.0
  %207 = vmatpush1.msra.mxu0 %v70
  %208 = vmatprep.subr.mxu0 0.0
  %209 = vmatpush1.msra.mxu0 %v71
  %210 = vmatprep.subr.mxu0 0.0
  %211 = vmatpush1.msra.mxu0 %v72
  %212 = vmatprep.subr.mxu0 0.0
  %213 = vmatpush1.msra.mxu0 %v73
  %214 = vmatprep.subr.mxu0 0.0
  %215 = vmatpush1.msra.mxu0 %v74
  %216 = vmatprep.subr.mxu0 0.0
  %217 = vmatpush1.msra.mxu0 %v75
  %218 = vmatprep.subr.mxu0 0.0
  %219 = vmatpush1.msra.mxu0 %v76
  %220 = vmatprep.subr.mxu0 0.0
  %221 = vmatpush1.msra.mxu0 %v77
  %222 = vmatprep.subr.mxu0 0.0
  %223 = vmatpush1.msra.mxu0 0.0
  %224 = vmatprep.subr.mxu0 0.0
  %225 = vmatpush1.msra.mxu0 0.0
  %226 = vmatprep.subr.mxu0 0.0
  %227 = vmatpush1.msra.mxu0 0.0
  %228 = vmatprep.subr.mxu0 0.0
  %229 = vmatpush1.msra.mxu0 0.0
  %230 = vmatprep.subr.mxu0 0.0
  %231 = vmatpush1.msra.mxu0 0.0
  %232 = vmatprep.subr.mxu0 0.0
  %233 = vmatpush1.msra.mxu0 0.0
  %234 = vmatprep.subr.mxu0 0.0
  %235 = vmatpush1.msra.mxu0 0.0
  %236 = vmatprep.subr.mxu0 0.0
  %237 = vmatpush1.msra.mxu0 0.0
  %238 = vmatprep.subr.mxu0 0.0
  %239 = vmatpush1.msra.mxu0 0.0
  %240 = vmatprep.subr.mxu0 0.0
  %241 = vmatpush1.msra.mxu0 0.0
  %242 = vmatprep.subr.mxu0 0.0
  %243 = vmatpush1.msra.mxu0 0.0
  %244 = vmatprep.subr.mxu0 0.0
  %245 = vmatpush1.msra.mxu0 0.0
  %246 = vmatprep.subr.mxu0 0.0
  %247 = vmatpush1.msra.mxu0 0.0
  %248 = vmatprep.subr.mxu0 0.0
  %249 = vmatpush1.msra.mxu0 0.0
  %250 = vmatprep.subr.mxu0 0.0
  %251 = vmatpush1.msra.mxu0 0.0
  %252 = vmatprep.subr.mxu0 0.0
  %253 = vmatpush1.msra.mxu0 0.0
  %254 = vmatprep.mubr.f32.mxu0 0.0
  %255 = vmatmul.mubr.f32.gmra.mrb[0].mxu0 %v57
  %v256 = vpop.f32.mrb[0].mxu0
  %v257 = vadd.f32 %v167, %v256
  %v258 = vpop.f32.mrb[0].mxu0
  %259 = vmatprep.mubr.f32.mxu0 0.0
  %260 = vmatmul.mubr.f32.gmra.mrb[0].mxu0 %v58
  %v261 = vpop.f32.mrb[0].mxu0
  %v262 = vadd.f32 %v172, %v261
  %v263 = vpop.f32.mrb[0].mxu0
  %264 = vmatprep.mubr.f32.mxu0 0.0
  %265 = vmatmul.mubr.f32.gmra.mrb[0].mxu0 %v59
  %v266 = vpop.f32.mrb[0].mxu0
  %v267 = vadd.f32 %v177, %v266
  %v268 = vpop.f32.mrb[0].mxu0
  %269 = vmatprep.mubr.f32.mxu0 0.0
  %270 = vmatmul.mubr.f32.gmra.mrb[0].mxu0 %v60
  %v271 = vpop.f32.mrb[0].mxu0
  %v272 = vadd.f32 %v182, %v271
  %v273 = vpop.f32.mrb[0].mxu0
  %274 = vmatprep.mubr.f32.mxu0 0.0
  %275 = vmatmul.mubr.f32.gmra.mrb[0].mxu0 %v61
  %v276 = vpop.f32.mrb[0].mxu0
  %v277 = vadd.f32 %v187, %v276
  %v278 = vpop.f32.mrb[0].mxu0
  %279 = vdwg.mxu0
  %v280 = vld [vmem:[#allocation2 + $0x2] sm:$0xff]
  %v281 = vld [vmem:[#allocation2 + $0xa] sm:$0xff]
  %v282 = vld [vmem:[#allocation2 + $0x12] sm:$0xff]
  %v283 = vld [vmem:[#allocation2 + $0x1a] sm:$0xff]
  %v284 = vld [vmem:[#allocation2 + $0x22] sm:$0x3]
  %s285 = scalar_lea.vmem %s1, 256
  %v286 = vld [vmem:[%s285] sm:$0xff]
  %v287 = vld [vmem:[%s285 + $0x8] sm:$0xff]
  %v288 = vld [vmem:[%s285 + $0x10] sm:$0xff]
  %v289 = vld [vmem:[%s285 + $0x18] sm:$0xff]
  %v290 = vld [vmem:[%s285 + $0x20] sm:$0xff]
  %v291 = vld [vmem:[%s285 + $0x28] sm:$0xff]
  %v292 = vld [vmem:[%s285 + $0x30] sm:$0xff]
  %v293 = vld [vmem:[%s285 + $0x38] sm:$0xff]
  %v294 = vld [vmem:[%s285 + $0x40] sm:$0xff]
  %v295 = vld [vmem:[%s285 + $0x48] sm:$0xff]
  %v296 = vld [vmem:[%s285 + $0x50] sm:$0xff]
  %v297 = vld [vmem:[%s285 + $0x58] sm:$0xff]
  %v298 = vld [vmem:[%s285 + $0x60] sm:$0xff]
  %v299 = vld [vmem:[%s285 + $0x68] sm:$0xff]
  %v300 = vld [vmem:[%s285 + $0x70] sm:$0xff]
  %v301 = vld [vmem:[%s285 + $0x78] sm:$0xff]
  %302 = vmatprep.subr.mxu0 0.0
  %303 = vmatpush1.msra.mxu0 %v286
  %304 = vmatprep.subr.mxu0 0.0
  %305 = vmatpush1.msra.mxu0 %v287
  %306 = vmatprep.subr.mxu0 0.0
  %307 = vmatpush1.msra.mxu0 %v288
  %308 = vmatprep.subr.mxu0 0.0
  %309 = vmatpush1.msra.mxu0 %v289
  %310 = vmatprep.subr.mxu0 0.0
  %311 = vmatpush1.msra.mxu0 %v290
  %312 = vmatprep.subr.mxu0 0.0
  %313 = vmatpush1.msra.mxu0 %v291
  %314 = vmatprep.subr.mxu0 0.0
  %315 = vmatpush1.msra.mxu0 %v292
  %316 = vmatprep.subr.mxu0 0.0
  %317 = vmatpush1.msra.mxu0 %v293
  %318 = vmatprep.subr.mxu0 0.0
  %319 = vmatpush1.msra.mxu0 %v294
  %320 = vmatprep.subr.mxu0 0.0
  %321 = vmatpush1.msra.mxu0 %v295
  %322 = vmatprep.subr.mxu0 0.0
  %323 = vmatpush1.msra.mxu0 %v296
  %324 = vmatprep.subr.mxu0 0.0
  %325 = vmatpush1.msra.mxu0 %v297
  %326 = vmatprep.subr.mxu0 0.0
  %327 = vmatpush1.msra.mxu0 %v298
  %328 = vmatprep.subr.mxu0 0.0
  %329 = vmatpush1.msra.mxu0 %v299
  %330 = vmatprep.subr.mxu0 0.0
  %331 = vmatpush1.msra.mxu0 %v300
  %332 = vmatprep.subr.mxu0 0.0
  %333 = vmatpush1.msra.mxu0 %v301
  %334 = vmatprep.subr.mxu0 0.0
  %335 = vmatpush1.msra.mxu0 0.0
  %336 = vmatprep.subr.mxu0 0.0
  %337 = vmatpush1.msra.mxu0 0.0
  %338 = vmatprep.subr.mxu0 0.0
  %339 = vmatpush1.msra.mxu0 0.0
  %340 = vmatprep.subr.mxu0 0.0
  %341 = vmatpush1.msra.mxu0 0.0
  %342 = vmatprep.subr.mxu0 0.0
  %343 = vmatpush1.msra.mxu0 0.0
  %344 = vmatprep.subr.mxu0 0.0
  %345 = vmatpush1.msra.mxu0 0.0
  %346 = vmatprep.subr.mxu0 0.0
  %347 = vmatpush1.msra.mxu0 0.0
  %348 = vmatprep.subr.mxu0 0.0
  %349 = vmatpush1.msra.mxu0 0.0
  %350 = vmatprep.subr.mxu0 0.0
  %351 = vmatpush1.msra.mxu0 0.0
  %352 = vmatprep.subr.mxu0 0.0
  %353 = vmatpush1.msra.mxu0 0.0
  %354 = vmatprep.subr.mxu0 0.0
  %355 = vmatpush1.msra.mxu0 0.0
  %356 = vmatprep.subr.mxu0 0.0
  %357 = vmatpush1.msra.mxu0 0.0
  %358 = vmatprep.subr.mxu0 0.0
  %359 = vmatpush1.msra.mxu0 0.0
  %360 = vmatprep.subr.mxu0 0.0
  %361 = vmatpush1.msra.mxu0 0.0
  %362 = vmatprep.subr.mxu0 0.0
  %363 = vmatpush1.msra.mxu0 0.0
  %364 = vmatprep.subr.mxu0 0.0
  %365 = vmatpush1.msra.mxu0 0.0
  %366 = vmatprep.mubr.f32.mxu0 0.0
  %367 = vmatmul.mubr.f32.gmra.mrb[0].mxu0 %v280
  %v368 = vpop.f32.mrb[0].mxu0
  %v369 = vadd.f32 0.0, %v368
  %v370 = vpop.f32.mrb[0].mxu0
  %371 = vmatprep.mubr.f32.mxu0 0.0
  %372 = vmatmul.mubr.f32.gmra.mrb[0].mxu0 %v281
  %v373 = vpop.f32.mrb[0].mxu0
  %v374 = vadd.f32 0.0, %v373
  %v375 = vpop.f32.mrb[0].mxu0
  %376 = vmatprep.mubr.f32.mxu0 0.0
  %377 = vmatmul.mubr.f32.gmra.mrb[0].mxu0 %v282
  %v378 = vpop.f32.mrb[0].mxu0
  %v379 = vadd.f32 0.0, %v378
  %v380 = vpop.f32.mrb[0].mxu0
  %381 = vmatprep.mubr.f32.mxu0 0.0
  %382 = vmatmul.mubr.f32.gmra.mrb[0].mxu0 %v283
  %v383 = vpop.f32.mrb[0].mxu0
  %v384 = vadd.f32 0.0, %v383
  %v385 = vpop.f32.mrb[0].mxu0
  %386 = vmatprep.mubr.f32.mxu0 0.0
  %387 = vmatmul.mubr.f32.gmra.mrb[0].mxu0 %v284
  %v388 = vpop.f32.mrb[0].mxu0
  %v389 = vadd.f32 0.0, %v388
  %v390 = vpop.f32.mrb[0].mxu0
  %391 = vdwg.mxu0
  %v392 = vadd.f32 %v257, %v369
  %v393 = vadd.f32 %v262, %v374
  %v394 = vadd.f32 %v267, %v379
  %v395 = vadd.f32 %v272, %v384
  %v396 = vadd.f32 %v277, %v389
  %397 = vst [vmem:[%s4] sm:$0xff] %v392
  %398 = vst [vmem:[%s4 + $0x8] sm:$0xff] %v393
  %v399 = vadd.f32 %v392, %v393
  %v400 = vrot.slane %v399, 4
  %v401 = vadd.f32 %v399, %v400
  %v402 = vrot.slane %v401, 2
  %v403 = vadd.f32 %v401, %v402
  %v404 = vrot.slane %v403, 1
  %v405 = vadd.f32 %v403, %v404
  %v406 = vadd.f32 %v405, 0.0
  %v407 = vmul.f32 %v392, %v392
  %v408 = vmul.f32 %v393, %v393
  %v409 = vadd.f32 %v407, %v408
  %v410 = vrot.slane %v409, 4
  %v411 = vadd.f32 %v409, %v410
  %v412 = vrot.slane %v411, 2
  %v413 = vadd.f32 %v411, %v412
  %v414 = vrot.slane %v413, 1
  %v415 = vadd.f32 %v413, %v414
  %v416 = vadd.f32 %v415, 0.0
  %s417 = scalar_lea.vmem %s4, 16
  %418 = vst [vmem:[%s417 - $0x2] sm:$0xfc] %v394
  %419 = vst [vmem:[%s417 + $0x6] sm:$0xff] %v395
  %420 = vst [vmem:[%s417 + $0xe] sm:$0x3] %v396
  %vm424 = vcmask 1045504
  %v425 = vrot.slane %v394, 2
  %v426 = vrot.slane %v395, 2
  %v427 = vsel %vm424, %v425, %v426
  %v428 = vrot.slane %v396, 2
  %v429 = vsel %vm424, %v426, %v428
  %v432 = vadd.f32 %v427, %v429
  %v433 = vrot.slane %v432, 4
  %v434 = vadd.f32 %v432, %v433
  %v435 = vrot.slane %v434, 2
  %v436 = vadd.f32 %v434, %v435
  %v437 = vrot.slane %v436, 1
  %v438 = vadd.f32 %v436, %v437
  %v439 = vadd.f32 %v406, %v438
  %v440 = vmul.f32 %v394, %v394
  %v441 = vmul.f32 %v395, %v395
  %v442 = vmul.f32 %v396, %v396
  %v446 = vrot.slane %v440, 2
  %v447 = vrot.slane %v441, 2
  %v448 = vsel %vm424, %v446, %v447
  %v449 = vrot.slane %v442, 2
  %v450 = vsel %vm424, %v447, %v449
  %v453 = vadd.f32 %v448, %v450
  %v454 = vrot.slane %v453, 4
  %v455 = vadd.f32 %v453, %v454
  %v456 = vrot.slane %v455, 2
  %v457 = vadd.f32 %v455, %v456
  %v458 = vrot.slane %v457, 1
  %v459 = vadd.f32 %v457, %v458
  %v460 = vadd.f32 %v416, %v459
  %461 = vst [vmem:[%s5] sm:$0x1] %v439
  %462 = vst [vmem:[%s5 + $0x1] sm:$0x1] %v460
  // Predicated region
  $region18: #{up_forward.4} parent=0 // pred_check
    _
  $region19: #{up_forward.4} parent=0 // pred_check_branch
    %464 = sbr.rel (0) target = $region21
  $region20: #{up_forward.4} parent=0 // pred_region
    _
  $region21: #{up_forward.4} parent=0 // pred_fallthru
    _
  // Predicated region
  $region22: #{up_forward.4} parent=0 // pred_check
    _
  $region23: #{up_forward.4} parent=0 // pred_check_branch
    %466 = sbr.rel (0) target = $region25
  $region24: #{up_forward.4} parent=0 // pred_region
    _
  $region25: #{up_forward.4} parent=0 // pred_fallthru
    _
  // Predicated region
  $region26: #{up_forward.4} parent=0 // pred_check
    _
  $region27: #{up_forward.4} parent=0 // pred_check_branch
    %468 = sbr.rel (0) target = $region29
  $region28: #{up_forward.4} parent=0 // pred_region
    _
  $region29: #{up_forward.4} parent=0 // pred_fallthru
    _
  // Predicated region
  $region30: #{up_forward.4} parent=0 // pred_check
    _
  $region31: #{up_forward.4} parent=0 // pred_check_branch
    %470 = sbr.rel (0) target = $region33
  $region32: #{up_forward.4} parent=0 // pred_region
    _
  $region33: #{up_forward.4} parent=0 // pred_fallthru
    _

// kernel: up_forward.3
$region0: #{up_forward.3}
  #allocation0 [shape = 'u32[]', space=smem, size = 0x4, offset = 0x4, fixed_abs, tag = 'smem constant byte address 0x4 - core index']
  #allocation1 [shape = 'u32[144,128]{1,0:T(1,128)}', space=vmem, size = 0x12000, scoped, tag = 'internal scratch']
  #allocation2 [shape = 'f32[36,128]{1,0:T(8,128)}', space=vmem, size = 0x5000, scoped, tag = 'scratch operand']
  %s0 = inlined_call_operand.vmem [shape: f32[2,16,64], index: 0, kind: input, shape index: {}]
  %s1 = inlined_call_operand.vmem [shape: f32[2,16,64], index: 1, kind: input, shape index: {}]
  %s2 = inlined_call_operand.vmem [shape: f32[3,128,128], index: 2, kind: input, shape index: {}]
  %s3 = inlined_call_operand.vmem [shape: f32[2,16,128], index: 3, kind: output, shape index: {0}]
  %s4 = inlined_call_operand.vmem [shape: f32[1,2,128], index: 4, kind: output, shape index: {1}]
  %5 = xla_tuple %s3, %s4
  %s6 = sld [smem:[#allocation0]]
  $region30: #{up_forward.3} parent=0
    _
  %s8 = ssub.s32 1, %s6
  %s9 = scalar_select 0, %s8, %s6
  // Predicated region
  $region2: #{up_forward.3} parent=0 // pred_check
    _
  $region3: #{up_forward.3} parent=0 // pred_check_branch
    %11 = sbr.rel (0) target = $region5
  $region4: #{up_forward.3} parent=0 // pred_region
    _
  $region5: #{up_forward.3} parent=0 // pred_fallthru
    _
  // Predicated region
  $region6: #{up_forward.3} parent=0 // pred_check
    _
  $region7: #{up_forward.3} parent=0 // pred_check_branch
    %13 = sbr.rel (0) target = $region9
  $region8: #{up_forward.3} parent=0 // pred_region
    _
  $region9: #{up_forward.3} parent=0 // pred_fallthru
    _
  // Predicated region
  $region10: #{up_forward.3} parent=0 // pred_check
    _
  $region11: #{up_forward.3} parent=0 // pred_check_branch
    %15 = sbr.rel (0) target = $region13
  $region12: #{up_forward.3} parent=0 // pred_region
    _
  $region13: #{up_forward.3} parent=0 // pred_fallthru
    _
  %16 = vst [vmem:[#allocation2] sm:$0x1] 0.0
  %17 = vst [vmem:[#allocation2 + $0x11] sm:$0x1] 0.0
  %18 = vst [vmem:[#allocation2 + $0x12] sm:$0x1] 0.0
  %19 = vst [vmem:[#allocation2 + $0x23] sm:$0x1] 0.0
  %v20 = vld [vmem:[%s0] sm:$0xff]
  %v21 = vld [vmem:[%s0 + $0x8] sm:$0xff]
  %v22 = vld [vmem:[%s0 + $0x10] sm:$0xff]
  %v23 = vld [vmem:[%s0 + $0x18] sm:$0xff]
  %vm24 = vcmask 523264
  %25 = vst.msk [vmem:[#allocation2 + $0x1] sm:$0xff] %vm24, %v20
  %26 = vst.msk [vmem:[#allocation2 + $0x9] sm:$0xff] %vm24, %v21
  %27 = vst.msk [vmem:[#allocation2 + $0x13] sm:$0xff] %vm24, %v22
  %28 = vst.msk [vmem:[#allocation2 + $0x1b] sm:$0xff] %vm24, %v23
  %v29 = vld [vmem:[%s1] sm:$0xff]
  %v30 = vld [vmem:[%s1 + $0x8] sm:$0xff]
  %v31 = vld [vmem:[%s1 + $0x10] sm:$0xff]
  %v32 = vld [vmem:[%s1 + $0x18] sm:$0xff]
  %35 = vrot.lane.b32.xlu0 %v29, 64
  %v36 = vpop.permute.xlu0 %35
  %37 = vrot.lane.b32.xlu0 %v30, 64
  %v38 = vpop.permute.xlu0 %37
  %vm41 = vcmask 1048064
  %42 = vst.msk [vmem:[#allocation2 + $0x1] sm:$0xff] %vm41, %v36
  %43 = vst.msk [vmem:[#allocation2 + $0x9] sm:$0xff] %vm41, %v38
  %46 = vrot.lane.b32.xlu0 %v31, 64
  %v47 = vpop.permute.xlu0 %46
  %48 = vrot.lane.b32.xlu0 %v32, 64
  %v49 = vpop.permute.xlu0 %48
  %52 = vst.msk [vmem:[#allocation2 + $0x13] sm:$0xff] %vm41, %v47
  %53 = vst.msk [vmem:[#allocation2 + $0x1b] sm:$0xff] %vm41, %v49
  %v54 = vld [vmem:[#allocation2] sm:$0xff]
  %v55 = vld [vmem:[#allocation2 + $0x8] sm:$0xff]
  %v56 = vld [vmem:[#allocation2 + $0x10] sm:$0xff]
  %v57 = vld [vmem:[#allocation2 + $0x18] sm:$0xff]
  %v58 = vld [vmem:[#allocation2 + $0x20] sm:$0x3]
  %v59 = vld [vmem:[%s2] sm:$0xff]
  %v60 = vld [vmem:[%s2 + $0x8] sm:$0xff]
  %v61 = vld [vmem:[%s2 + $0x10] sm:$0xff]
  %v62 = vld [vmem:[%s2 + $0x18] sm:$0xff]
  %v63 = vld [vmem:[%s2 + $0x20] sm:$0xff]
  %v64 = vld [vmem:[%s2 + $0x28] sm:$0xff]
  %v65 = vld [vmem:[%s2 + $0x30] sm:$0xff]
  %v66 = vld [vmem:[%s2 + $0x38] sm:$0xff]
  %v67 = vld [vmem:[%s2 + $0x40] sm:$0xff]
  %v68 = vld [vmem:[%s2 + $0x48] sm:$0xff]
  %v69 = vld [vmem:[%s2 + $0x50] sm:$0xff]
  %v70 = vld [vmem:[%s2 + $0x58] sm:$0xff]
  %v71 = vld [vmem:[%s2 + $0x60] sm:$0xff]
  %v72 = vld [vmem:[%s2 + $0x68] sm:$0xff]
  %v73 = vld [vmem:[%s2 + $0x70] sm:$0xff]
  %v74 = vld [vmem:[%s2 + $0x78] sm:$0xff]
  %v75 = vld [vmem:[#allocation2 + $0x1] sm:$0xff]
  %v76 = vld [vmem:[#allocation2 + $0x9] sm:$0xff]
  %v77 = vld [vmem:[#allocation2 + $0x11] sm:$0xff]
  %v78 = vld [vmem:[#allocation2 + $0x19] sm:$0xff]
  %v79 = vld [vmem:[#allocation2 + $0x21] sm:$0x3]
  %s80 = scalar_lea.vmem %s2, 128
  %v81 = vld [vmem:[%s80] sm:$0xff]
  %v82 = vld [vmem:[%s80 + $0x8] sm:$0xff]
  %v83 = vld [vmem:[%s80 + $0x10] sm:$0xff]
  %v84 = vld [vmem:[%s80 + $0x18] sm:$0xff]
  %v85 = vld [vmem:[%s80 + $0x20] sm:$0xff]
  %v86 = vld [vmem:[%s80 + $0x28] sm:$0xff]
  %v87 = vld [vmem:[%s80 + $0x30] sm:$0xff]
  %v88 = vld [vmem:[%s80 + $0x38] sm:$0xff]
  %v89 = vld [vmem:[%s80 + $0x40] sm:$0xff]
  %v90 = vld [vmem:[%s80 + $0x48] sm:$0xff]
  %v91 = vld [vmem:[%s80 + $0x50] sm:$0xff]
  %v92 = vld [vmem:[%s80 + $0x58] sm:$0xff]
  %v93 = vld [vmem:[%s80 + $0x60] sm:$0xff]
  %v94 = vld [vmem:[%s80 + $0x68] sm:$0xff]
  %v95 = vld [vmem:[%s80 + $0x70] sm:$0xff]
  %v96 = vld [vmem:[%s80 + $0x78] sm:$0xff]
  %97 = vmatprep.subr.mxu0 0.0
  %98 = vmatpush1.msra.mxu0 %v81
  %99 = vmatprep.subr.mxu0 0.0
  %100 = vmatpush1.msra.mxu0 %v82
  %101 = vmatprep.subr.mxu0 0.0
  %102 = vmatpush1.msra.mxu0 %v83
  %103 = vmatprep.subr.mxu0 0.0
  %104 = vmatpush1.msra.mxu0 %v84
  %105 = vmatprep.subr.mxu0 0.0
  %106 = vmatpush1.msra.mxu0 %v85
  %107 = vmatprep.subr.mxu0 0.0
  %108 = vmatpush1.msra.mxu0 %v86
  %109 = vmatprep.subr.mxu0 0.0
  %110 = vmatpush1.msra.mxu0 %v87
  %111 = vmatprep.subr.mxu0 0.0
  %112 = vmatpush1.msra.mxu0 %v88
  %113 = vmatprep.subr.mxu0 0.0
  %114 = vmatpush1.msra.mxu0 %v89
  %115 = vmatprep.subr.mxu0 0.0
  %116 = vmatpush1.msra.mxu0 %v90
  %117 = vmatprep.subr.mxu0 0.0
  %118 = vmatpush1.msra.mxu0 %v91
  %119 = vmatprep.subr.mxu0 0.0
  %120 = vmatpush1.msra.mxu0 %v92
  %121 = vmatprep.subr.mxu0 0.0
  %122 = vmatpush1.msra.mxu0 %v93
  %123 = vmatprep.subr.mxu0 0.0
  %124 = vmatpush1.msra.mxu0 %v94
  %125 = vmatprep.subr.mxu0 0.0
  %126 = vmatpush1.msra.mxu0 %v95
  %127 = vmatprep.subr.mxu0 0.0
  %128 = vmatpush1.msra.mxu0 %v96
  %129 = vmatprep.subr.mxu0 0.0
  %130 = vmatpush1.msra.mxu0 0.0
  %131 = vmatprep.subr.mxu0 0.0
  %132 = vmatpush1.msra.mxu0 0.0
  %133 = vmatprep.subr.mxu0 0.0
  %134 = vmatpush1.msra.mxu0 0.0
  %135 = vmatprep.subr.mxu0 0.0
  %136 = vmatpush1.msra.mxu0 0.0
  %137 = vmatprep.subr.mxu0 0.0
  %138 = vmatpush1.msra.mxu0 0.0
  %139 = vmatprep.subr.mxu0 0.0
  %140 = vmatpush1.msra.mxu0 0.0
  %141 = vmatprep.subr.mxu0 0.0
  %142 = vmatpush1.msra.mxu0 0.0
  %143 = vmatprep.subr.mxu0 0.0
  %144 = vmatpush1.msra.mxu0 0.0
  %145 = vmatprep.subr.mxu0 0.0
  %146 = vmatpush1.msra.mxu0 0.0
  %147 = vmatprep.subr.mxu0 0.0
  %148 = vmatpush1.msra.mxu0 0.0
  %149 = vmatprep.subr.mxu0 0.0
  %150 = vmatpush1.msra.mxu0 0.0
  %151 = vmatprep.subr.mxu0 0.0
  %152 = vmatpush1.msra.mxu0 0.0
  %153 = vmatprep.subr.mxu0 0.0
  %154 = vmatpush1.msra.mxu0 0.0
  %155 = vmatprep.subr.mxu0 0.0
  %156 = vmatpush1.msra.mxu0 0.0
  %157 = vmatprep.subr.mxu0 0.0
  %158 = vmatpush1.msra.mxu0 0.0
  %159 = vmatprep.subr.mxu0 0.0
  %160 = vmatpush1.msra.mxu0 0.0
  %161 = vmatprep.mubr.f32.mxu0 0.0
  %162 = vmatmul.mubr.f32.gmra.mrb[0].mxu0 %v75
  %v163 = vpop.f32.mrb[0].mxu0
  %v164 = vadd.f32 0.0, %v163
  %v165 = vpop.f32.mrb[0].mxu0
  %166 = vmatprep.mubr.f32.mxu0 0.0
  %167 = vmatmul.mubr.f32.gmra.mrb[0].mxu0 %v76
  %v168 = vpop.f32.mrb[0].mxu0
  %v169 = vadd.f32 0.0, %v168
  %v170 = vpop.f32.mrb[0].mxu0
  %171 = vmatprep.mubr.f32.mxu0 0.0
  %172 = vmatmul.mubr.f32.gmra.mrb[0].mxu0 %v77
  %v173 = vpop.f32.mrb[0].mxu0
  %v174 = vadd.f32 0.0, %v173
  %v175 = vpop.f32.mrb[0].mxu0
  %176 = vmatprep.mubr.f32.mxu0 0.0
  %177 = vmatmul.mubr.f32.gmra.mrb[0].mxu0 %v78
  %v178 = vpop.f32.mrb[0].mxu0
  %v179 = vadd.f32 0.0, %v178
  %v180 = vpop.f32.mrb[0].mxu0
  %181 = vmatprep.mubr.f32.mxu0 0.0
  %182 = vmatmul.mubr.f32.gmra.mrb[0].mxu0 %v79
  %v183 = vpop.f32.mrb[0].mxu0
  %v184 = vadd.f32 0.0, %v183
  %v185 = vpop.f32.mrb[0].mxu0
  %186 = vdwg.mxu0
  %187 = vmatprep.subr.mxu0 0.0
  %188 = vmatpush1.msra.mxu0 %v59
  %189 = vmatprep.subr.mxu0 0.0
  %190 = vmatpush1.msra.mxu0 %v60
  %191 = vmatprep.subr.mxu0 0.0
  %192 = vmatpush1.msra.mxu0 %v61
  %193 = vmatprep.subr.mxu0 0.0
  %194 = vmatpush1.msra.mxu0 %v62
  %195 = vmatprep.subr.mxu0 0.0
  %196 = vmatpush1.msra.mxu0 %v63
  %197 = vmatprep.subr.mxu0 0.0
  %198 = vmatpush1.msra.mxu0 %v64
  %199 = vmatprep.subr.mxu0 0.0
  %200 = vmatpush1.msra.mxu0 %v65
  %201 = vmatprep.subr.mxu0 0.0
  %202 = vmatpush1.msra.mxu0 %v66
  %203 = vmatprep.subr.mxu0 0.0
  %204 = vmatpush1.msra.mxu0 %v67
  %205 = vmatprep.subr.mxu0 0.0
  %206 = vmatpush1.msra.mxu0 %v68
  %207 = vmatprep.subr.mxu0 0.0
  %208 = vmatpush1.msra.mxu0 %v69
  %209 = vmatprep.subr.mxu0 0.0
  %210 = vmatpush1.msra.mxu0 %v70
  %211 = vmatprep.subr.mxu0 0.0
  %212 = vmatpush1.msra.mxu0 %v71
  %213 = vmatprep.subr.mxu0 0.0
  %214 = vmatpush1.msra.mxu0 %v72
  %215 = vmatprep.subr.mxu0 0.0
  %216 = vmatpush1.msra.mxu0 %v73
  %217 = vmatprep.subr.mxu0 0.0
  %218 = vmatpush1.msra.mxu0 %v74
  %219 = vmatprep.subr.mxu0 0.0
  %220 = vmatpush1.msra.mxu0 0.0
  %221 = vmatprep.subr.mxu0 0.0
  %222 = vmatpush1.msra.mxu0 0.0
  %223 = vmatprep.subr.mxu0 0.0
  %224 = vmatpush1.msra.mxu0 0.0
  %225 = vmatprep.subr.mxu0 0.0
  %226 = vmatpush1.msra.mxu0 0.0
  %227 = vmatprep.subr.mxu0 0.0
  %228 = vmatpush1.msra.mxu0 0.0
  %229 = vmatprep.subr.mxu0 0.0
  %230 = vmatpush1.msra.mxu0 0.0
  %231 = vmatprep.subr.mxu0 0.0
  %232 = vmatpush1.msra.mxu0 0.0
  %233 = vmatprep.subr.mxu0 0.0
  %234 = vmatpush1.msra.mxu0 0.0
  %235 = vmatprep.subr.mxu0 0.0
  %236 = vmatpush1.msra.mxu0 0.0
  %237 = vmatprep.subr.mxu0 0.0
  %238 = vmatpush1.msra.mxu0 0.0
  %239 = vmatprep.subr.mxu0 0.0
  %240 = vmatpush1.msra.mxu0 0.0
  %241 = vmatprep.subr.mxu0 0.0
  %242 = vmatpush1.msra.mxu0 0.0
  %243 = vmatprep.subr.mxu0 0.0
  %244 = vmatpush1.msra.mxu0 0.0
  %245 = vmatprep.subr.mxu0 0.0
  %246 = vmatpush1.msra.mxu0 0.0
  %247 = vmatprep.subr.mxu0 0.0
  %248 = vmatpush1.msra.mxu0 0.0
  %249 = vmatprep.subr.mxu0 0.0
  %250 = vmatpush1.msra.mxu0 0.0
  %251 = vmatprep.mubr.f32.mxu0 0.0
  %252 = vmatmul.mubr.f32.gmra.mrb[0].mxu0 %v54
  %v253 = vpop.f32.mrb[0].mxu0
  %v254 = vadd.f32 %v164, %v253
  %v255 = vpop.f32.mrb[0].mxu0
  %256 = vmatprep.mubr.f32.mxu0 0.0
  %257 = vmatmul.mubr.f32.gmra.mrb[0].mxu0 %v55
  %v258 = vpop.f32.mrb[0].mxu0
  %v259 = vadd.f32 %v169, %v258
  %v260 = vpop.f32.mrb[0].mxu0
  %261 = vmatprep.mubr.f32.mxu0 0.0
  %262 = vmatmul.mubr.f32.gmra.mrb[0].mxu0 %v56
  %v263 = vpop.f32.mrb[0].mxu0
  %v264 = vadd.f32 %v174, %v263
  %v265 = vpop.f32.mrb[0].mxu0
  %266 = vmatprep.mubr.f32.mxu0 0.0
  %267 = vmatmul.mubr.f32.gmra.mrb[0].mxu0 %v57
  %v268 = vpop.f32.mrb[0].mxu0
  %v269 = vadd.f32 %v179, %v268
  %v270 = vpop.f32.mrb[0].mxu0
  %271 = vmatprep.mubr.f32.mxu0 0.0
  %272 = vmatmul.mubr.f32.gmra.mrb[0].mxu0 %v58
  %v273 = vpop.f32.mrb[0].mxu0
  %v274 = vadd.f32 %v184, %v273
  %v275 = vpop.f32.mrb[0].mxu0
  %276 = vdwg.mxu0
  %v277 = vld [vmem:[#allocation2 + $0x2] sm:$0xff]
  %v278 = vld [vmem:[#allocation2 + $0xa] sm:$0xff]
  %v279 = vld [vmem:[#allocation2 + $0x12] sm:$0xff]
  %v280 = vld [vmem:[#allocation2 + $0x1a] sm:$0xff]
  %v281 = vld [vmem:[#allocation2 + $0x22] sm:$0x3]
  %s282 = scalar_lea.vmem %s2, 256
  %v283 = vld [vmem:[%s282] sm:$0xff]
  %v284 = vld [vmem:[%s282 + $0x8] sm:$0xff]
  %v285 = vld [vmem:[%s282 + $0x10] sm:$0xff]
  %v286 = vld [vmem:[%s282 + $0x18] sm:$0xff]
  %v287 = vld [vmem:[%s282 + $0x20] sm:$0xff]
  %v288 = vld [vmem:[%s282 + $0x28] sm:$0xff]
  %v289 = vld [vmem:[%s282 + $0x30] sm:$0xff]
  %v290 = vld [vmem:[%s282 + $0x38] sm:$0xff]
  %v291 = vld [vmem:[%s282 + $0x40] sm:$0xff]
  %v292 = vld [vmem:[%s282 + $0x48] sm:$0xff]
  %v293 = vld [vmem:[%s282 + $0x50] sm:$0xff]
  %v294 = vld [vmem:[%s282 + $0x58] sm:$0xff]
  %v295 = vld [vmem:[%s282 + $0x60] sm:$0xff]
  %v296 = vld [vmem:[%s282 + $0x68] sm:$0xff]
  %v297 = vld [vmem:[%s282 + $0x70] sm:$0xff]
  %v298 = vld [vmem:[%s282 + $0x78] sm:$0xff]
  %299 = vmatprep.subr.mxu0 0.0
  %300 = vmatpush1.msra.mxu0 %v283
  %301 = vmatprep.subr.mxu0 0.0
  %302 = vmatpush1.msra.mxu0 %v284
  %303 = vmatprep.subr.mxu0 0.0
  %304 = vmatpush1.msra.mxu0 %v285
  %305 = vmatprep.subr.mxu0 0.0
  %306 = vmatpush1.msra.mxu0 %v286
  %307 = vmatprep.subr.mxu0 0.0
  %308 = vmatpush1.msra.mxu0 %v287
  %309 = vmatprep.subr.mxu0 0.0
  %310 = vmatpush1.msra.mxu0 %v288
  %311 = vmatprep.subr.mxu0 0.0
  %312 = vmatpush1.msra.mxu0 %v289
  %313 = vmatprep.subr.mxu0 0.0
  %314 = vmatpush1.msra.mxu0 %v290
  %315 = vmatprep.subr.mxu0 0.0
  %316 = vmatpush1.msra.mxu0 %v291
  %317 = vmatprep.subr.mxu0 0.0
  %318 = vmatpush1.msra.mxu0 %v292
  %319 = vmatprep.subr.mxu0 0.0
  %320 = vmatpush1.msra.mxu0 %v293
  %321 = vmatprep.subr.mxu0 0.0
  %322 = vmatpush1.msra.mxu0 %v294
  %323 = vmatprep.subr.mxu0 0.0
  %324 = vmatpush1.msra.mxu0 %v295
  %325 = vmatprep.subr.mxu0 0.0
  %326 = vmatpush1.msra.mxu0 %v296
  %327 = vmatprep.subr.mxu0 0.0
  %328 = vmatpush1.msra.mxu0 %v297
  %329 = vmatprep.subr.mxu0 0.0
  %330 = vmatpush1.msra.mxu0 %v298
  %331 = vmatprep.subr.mxu0 0.0
  %332 = vmatpush1.msra.mxu0 0.0
  %333 = vmatprep.subr.mxu0 0.0
  %334 = vmatpush1.msra.mxu0 0.0
  %335 = vmatprep.subr.mxu0 0.0
  %336 = vmatpush1.msra.mxu0 0.0
  %337 = vmatprep.subr.mxu0 0.0
  %338 = vmatpush1.msra.mxu0 0.0
  %339 = vmatprep.subr.mxu0 0.0
  %340 = vmatpush1.msra.mxu0 0.0
  %341 = vmatprep.subr.mxu0 0.0
  %342 = vmatpush1.msra.mxu0 0.0
  %343 = vmatprep.subr.mxu0 0.0
  %344 = vmatpush1.msra.mxu0 0.0
  %345 = vmatprep.subr.mxu0 0.0
  %346 = vmatpush1.msra.mxu0 0.0
  %347 = vmatprep.subr.mxu0 0.0
  %348 = vmatpush1.msra.mxu0 0.0
  %349 = vmatprep.subr.mxu0 0.0
  %350 = vmatpush1.msra.mxu0 0.0
  %351 = vmatprep.subr.mxu0 0.0
  %352 = vmatpush1.msra.mxu0 0.0
  %353 = vmatprep.subr.mxu0 0.0
  %354 = vmatpush1.msra.mxu0 0.0
  %355 = vmatprep.subr.mxu0 0.0
  %356 = vmatpush1.msra.mxu0 0.0
  %357 = vmatprep.subr.mxu0 0.0
  %358 = vmatpush1.msra.mxu0 0.0
  %359 = vmatprep.subr.mxu0 0.0
  %360 = vmatpush1.msra.mxu0 0.0
  %361 = vmatprep.subr.mxu0 0.0
  %362 = vmatpush1.msra.mxu0 0.0
  %363 = vmatprep.mubr.f32.mxu0 0.0
  %364 = vmatmul.mubr.f32.gmra.mrb[0].mxu0 %v277
  %v365 = vpop.f32.mrb[0].mxu0
  %v366 = vadd.f32 0.0, %v365
  %v367 = vpop.f32.mrb[0].mxu0
  %368 = vmatprep.mubr.f32.mxu0 0.0
  %369 = vmatmul.mubr.f32.gmra.mrb[0].mxu0 %v278
  %v370 = vpop.f32.mrb[0].mxu0
  %v371 = vadd.f32 0.0, %v370
  %v372 = vpop.f32.mrb[0].mxu0
  %373 = vmatprep.mubr.f32.mxu0 0.0
  %374 = vmatmul.mubr.f32.gmra.mrb[0].mxu0 %v279
  %v375 = vpop.f32.mrb[0].mxu0
  %v376 = vadd.f32 0.0, %v375
  %v377 = vpop.f32.mrb[0].mxu0
  %378 = vmatprep.mubr.f32.mxu0 0.0
  %379 = vmatmul.mubr.f32.gmra.mrb[0].mxu0 %v280
  %v380 = vpop.f32.mrb[0].mxu0
  %v381 = vadd.f32 0.0, %v380
  %v382 = vpop.f32.mrb[0].mxu0
  %383 = vmatprep.mubr.f32.mxu0 0.0
  %384 = vmatmul.mubr.f32.gmra.mrb[0].mxu0 %v281
  %v385 = vpop.f32.mrb[0].mxu0
  %v386 = vadd.f32 0.0, %v385
  %v387 = vpop.f32.mrb[0].mxu0
  %388 = vdwg.mxu0
  %v389 = vadd.f32 %v254, %v366
  %v390 = vadd.f32 %v259, %v371
  %v391 = vadd.f32 %v264, %v376
  %v392 = vadd.f32 %v269, %v381
  %v393 = vadd.f32 %v274, %v386
  %394 = vst [vmem:[%s3] sm:$0xff] %v389
  %395 = vst [vmem:[%s3 + $0x8] sm:$0xff] %v390
  %v396 = vadd.f32 %v389, %v390
  %v397 = vrot.slane %v396, 4
  %v398 = vadd.f32 %v396, %v397
  %v399 = vrot.slane %v398, 2
  %v400 = vadd.f32 %v398, %v399
  %v401 = vrot.slane %v400, 1
  %v402 = vadd.f32 %v400, %v401
  %v403 = vadd.f32 %v402, 0.0
  %v404 = vmul.f32 %v389, %v389
  %v405 = vmul.f32 %v390, %v390
  %v406 = vadd.f32 %v404, %v405
  %v407 = vrot.slane %v406, 4
  %v408 = vadd.f32 %v406, %v407
  %v409 = vrot.slane %v408, 2
  %v410 = vadd.f32 %v408, %v409
  %v411 = vrot.slane %v410, 1
  %v412 = vadd.f32 %v410, %v411
  %v413 = vadd.f32 %v412, 0.0
  %s414 = scalar_lea.vmem %s3, 16
  %415 = vst [vmem:[%s414 - $0x2] sm:$0xfc] %v391
  %416 = vst [vmem:[%s414 + $0x6] sm:$0xff] %v392
  %417 = vst [vmem:[%s414 + $0xe] sm:$0x3] %v393
  %vm421 = vcmask 1045504
  %v422 = vrot.slane %v391, 2
  %v423 = vrot.slane %v392, 2
  %v424 = vsel %vm421, %v422, %v423
  %v425 = vrot.slane %v393, 2
  %v426 = vsel %vm421, %v423, %v425
  %v429 = vadd.f32 %v424, %v426
  %v430 = vrot.slane %v429, 4
  %v431 = vadd.f32 %v429, %v430
  %v432 = vrot.slane %v431, 2
  %v433 = vadd.f32 %v431, %v432
  %v434 = vrot.slane %v433, 1
  %v435 = vadd.f32 %v433, %v434
  %v436 = vadd.f32 %v403, %v435
  %v437 = vmul.f32 %v391, %v391
  %v438 = vmul.f32 %v392, %v392
  %v439 = vmul.f32 %v393, %v393
  %v443 = vrot.slane %v437, 2
  %v444 = vrot.slane %v438, 2
  %v445 = vsel %vm421, %v443, %v444
  %v446 = vrot.slane %v439, 2
  %v447 = vsel %vm421, %v444, %v446
  %v450 = vadd.f32 %v445, %v447
  %v451 = vrot.slane %v450, 4
  %v452 = vadd.f32 %v450, %v451
  %v453 = vrot.slane %v452, 2
  %v454 = vadd.f32 %v452, %v453
  %v455 = vrot.slane %v454, 1
  %v456 = vadd.f32 %v454, %v455
  %v457 = vadd.f32 %v413, %v456
  %458 = vst [vmem:[%s4] sm:$0x1] %v436
  %459 = vst [vmem:[%s4 + $0x1] sm:$0x1] %v457
  // Predicated region
  $region14: #{up_forward.3} parent=0 // pred_check
    _
  $region15: #{up_forward.3} parent=0 // pred_check_branch
    %461 = sbr.rel (0) target = $region17
  $region16: #{up_forward.3} parent=0 // pred_region
    _
  $region17: #{up_forward.3} parent=0 // pred_fallthru
    _
  // Predicated region
  $region18: #{up_forward.3} parent=0 // pred_check
    _
  $region19: #{up_forward.3} parent=0 // pred_check_branch
    %463 = sbr.rel (0) target = $region21
  $region20: #{up_forward.3} parent=0 // pred_region
    _
  $region21: #{up_forward.3} parent=0 // pred_fallthru
    _
  // Predicated region
  $region22: #{up_forward.3} parent=0 // pred_check
    _
  $region23: #{up_forward.3} parent=0 // pred_check_branch
    %465 = sbr.rel (0) target = $region25
  $region24: #{up_forward.3} parent=0 // pred_region
    _
  $region25: #{up_forward.3} parent=0 // pred_fallthru
    _
  // Predicated region
  $region26: #{up_forward.3} parent=0 // pred_check
    _
  $region27: #{up_forward.3} parent=0 // pred_check_branch
    %467 = sbr.rel (0) target = $region29
  $region28: #{up_forward.3} parent=0 // pred_region
    _
  $region29: #{up_forward.3} parent=0 // pred_fallthru
    _

</llo_original>
